<compile_context>
chip_gen: v6e
topology: v6e:2x2x1
jax: 0.10.0
libtpu: 0.0.40
codegen_flags: <defaults>
</compile_context>

<pallas_src>
import math

import jax
import jax.numpy as jnp
from jax import lax
from jax.experimental import pallas as pl
from jax.experimental.pallas import tpu as pltpu

# ----------------------------- model config ---------------------------------
B = 2         # batch
S = 8         # sequence length
H = 32        # hidden size
NH = 2        # attention heads
HD = H // NH  # head dim
FF = 64       # FFN intermediate size
OUT = 3       # output_num of the regression head
VOCAB = 50    # synthetic vocabulary
L = 2         # encoder layers


# ------------------------- in-kernel helper math -----------------------------
def _layernorm(x, g, b, eps=1e-5):
    # TODO(synk): HF BERT uses eps=1e-12 and erf-GELU; tanh-GELU / eps=1e-5 kept
    # for TPU-friendly lowering (small systematic deviation, not a kernel bug).
    mu = jnp.mean(x, axis=-1, keepdims=True)
    xc = x - mu
    var = jnp.mean(xc * xc, axis=-1, keepdims=True)
    return xc * lax.rsqrt(var + eps) * g + b


def _gelu(x):
    c = math.sqrt(2.0 / math.pi)
    return 0.5 * x * (1.0 + jnp.tanh(c * (x + 0.044715 * x * x * x)))


# ------------------------- fused whole-forward kernel ------------------------
def llm_fwd_kernel(x_ref, mask_ref,
                   wqkv_ref, bqkv_ref, wo_ref, w1_ref, b1_ref, w2_ref, hp_ref,
                   headw_ref, headb_ref,
                   o_ref, x_scr):
    """Whole forward pass (all layers + CLS pool + regression head), one call.

    x_ref    : (B*S, H)   f32   flattened embeddings (batch rows on sublanes)
    mask_ref : (B*S, B*S) f32   additive block-diagonal attention mask
    wqkv_ref : (L, 3, NH, H, HD) bf16   per-head Q/K/V weights (Q pre-scaled)
    bqkv_ref : (L, 3, NH, 1, HD) f32    per-head Q/K/V biases  (Q pre-scaled)
    wo_ref   : (L, NH, HD, H)    bf16   per-head output-projection slabs
    w1_ref   : (L, H, FF) bf16 ; b1_ref : (L, 1, FF) f32 ; w2_ref : (L, FF, H)
    hp_ref   : (L, 6, H)  f32   rows = bo, ln1g, ln1b, b2, ln2g, ln2b
    headw_ref: (H, OUT) bf16 ;  headb_ref: (1, OUT) f32
    o_ref    : (B, OUT) f32 ;   x_scr: (B*S, H) f32 VMEM scratch (CLS gather)
    """
    f32, bf16 = jnp.float32, jnp.bfloat16
    n_rows, _ = x_ref.shape
    n_layers = wqkv_ref.shape[0]
    num_heads = wqkv_ref.shape[2]
    b_sz = o_ref.shape[0]
    s_len = n_rows // b_sz

    x = x_ref[...]                      # (B*S, H) f32
    amask = mask_ref[...]               # (B*S, B*S) f32, shared by all heads/layers

    # Static layer loop (L=2): fully unrolled for LLO scheduling visibility.
    for l in range(n_layers):
        hp = hp_ref[l]                  # (6, H)
        bo, ln1g, ln1b = hp[0:1], hp[1:2], hp[2:3]
        b2, ln2g, ln2b = hp[3:4], hp[4:5], hp[5:6]

        xb = x.astype(bf16)             # hoisted: one cast reused by 3*NH dots

        attn = None
        for h in range(num_heads):
            # Per-head projections: each weight owns its own tile, no lane slices.
            qh = (jnp.dot(xb, wqkv_ref[l, 0, h], preferred_element_type=f32)
                  + bqkv_ref[l, 0, h]).astype(bf16)              # (B*S, HD)
            kh = (jnp.dot(xb, wqkv_ref[l, 1, h], preferred_element_type=f32)
                  + bqkv_ref[l, 1, h]).astype(bf16)
            vh = (jnp.dot(xb, wqkv_ref[l, 2, h], preferred_element_type=f32)
                  + bqkv_ref[l, 2, h]).astype(bf16)

            # Scores without transposing K (contract head dim of both operands);
            # 1/sqrt(HD) is pre-folded into the Q weights.
            s = lax.dot_general(qh, kh, (((1,), (1,)), ((), ())),
                                preferred_element_type=f32)      # (B*S, B*S)
            s = s + amask
            s = s - jnp.max(s, axis=-1, keepdims=True)
            p = jnp.exp(s)
            p = p * pl.reciprocal(jnp.sum(p, axis=-1, keepdims=True),
                                  approx=True)
            ctx = jnp.dot(p.astype(bf16), vh,
                          preferred_element_type=f32)            # (B*S, HD)

            # Fold this head's slab of W_O here -> no lane concat of heads.
            part = jnp.dot(ctx.astype(bf16), wo_ref[l, h],
                           preferred_element_type=f32)           # (B*S, H)
            attn = part if attn is None else attn + part

        x1 = _layernorm(x + attn + bo, ln1g, ln1b)

        mid = _gelu(jnp.dot(x1.astype(bf16), w1_ref[l],
                            preferred_element_type=f32) + b1_ref[l])
        ffn = jnp.dot(mid.astype(bf16), w2_ref[l],
                      preferred_element_type=f32) + b2
        x = _layernorm(x1 + ffn, ln2g, ln2b)

    # CLS pooling: strided sublane read of rows 0, S, 2S, ... from VMEM scratch.
    x_scr[...] = x
    pooled = x_scr[pl.ds(0, b_sz, stride=s_len), :]              # (B, H)

    out = jnp.dot(pooled.astype(jnp.bfloat16), headw_ref[...],
                  preferred_element_type=f32) + headb_ref[...]
    o_ref[...] = out


def llm_pallas_forward(params, x_flat, add_mask):
    args = (x_flat, add_mask,
            params["wqkv"], params["bqkv"], params["wo"],
            params["w1"], params["b1"], params["w2"], params["hp"],
            params["head_w"], params["head_b"])
    n_rows, hid = x_flat.shape
    out_dim = params["head_w"].shape[1]
    vmem = lambda: pl.BlockSpec(memory_space=pltpu.MemorySpace.VMEM)
    return pl.pallas_call(
        llm_fwd_kernel,
        out_shape=jax.ShapeDtypeStruct((B, out_dim), jnp.float32),
        in_specs=[vmem() for _ in args],
        out_specs=vmem(),
        scratch_shapes=[pltpu.VMEM((n_rows, hid), jnp.float32)],
    )(*args)


# ------------------------------ parameter init -------------------------------
def init_params(key):
    def nrm(k, shape, scale=0.02):
        return (scale * jax.random.normal(k, shape)).astype(jnp.float32)

    keys = jax.random.split(key, 3 + L)
    inv_sqrt_hd = 1.0 / math.sqrt(HD)

    wqkv, bqkv, wo, w1, b1, w2, hp = [], [], [], [], [], [], []
    for l in range(L):
        lk = jax.random.split(keys[3 + l], 6)
        wq = nrm(lk[0], (H, H)) * inv_sqrt_hd        # fold 1/sqrt(HD) into Q
        wk = nrm(lk[1], (H, H))
        wv = nrm(lk[2], (H, H))
        # (3, NH, H, HD): each head's Q/K/V weight occupies its own tile.
        wqkv.append(jnp.stack(
            [w.reshape(H, NH, HD).transpose(1, 0, 2) for w in (wq, wk, wv)],
            axis=0))
        bqkv.append(jnp.zeros((3, NH, 1, HD), jnp.float32))   # (Q bias pre-scaled; zeros here)
        wo.append(nrm(lk[3], (H, H)).reshape(NH, HD, H))      # per-head W_O slabs
        w1.append(nrm(lk[4], (H, FF)))
        b1.append(jnp.zeros((1, FF), jnp.float32))
        w2.append(nrm(lk[5], (FF, H)))
        hp.append(jnp.stack([
            jnp.zeros((H,), jnp.float32),   # bo
            jnp.ones((H,), jnp.float32),    # ln1 gamma
            jnp.zeros((H,), jnp.float32),   # ln1 beta
            jnp.zeros((H,), jnp.float32),   # b2
            jnp.ones((H,), jnp.float32),    # ln2 gamma
            jnp.zeros((H,), jnp.float32),   # ln2 beta
        ], axis=0))                                            # (6, H)

    return {
        "tok_emb": nrm(keys[0], (VOCAB, H)),
        "pos_emb": nrm(keys[1], (S, H)),
        "head_w": nrm(keys[2], (H, OUT)).astype(jnp.bfloat16),  # (H, OUT)
        "head_b": jnp.zeros((1, OUT), jnp.float32),
        "wqkv": jnp.stack(wqkv).astype(jnp.bfloat16),           # (L, 3, NH, H, HD)
        "bqkv": jnp.stack(bqkv),                                # (L, 3, NH, 1, HD)
        "wo": jnp.stack(wo).astype(jnp.bfloat16),               # (L, NH, HD, H)
        "w1": jnp.stack(w1).astype(jnp.bfloat16),               # (L, H, FF)
        "b1": jnp.stack(b1),                                    # (L, 1, FF)
        "w2": jnp.stack(w2).astype(jnp.bfloat16),               # (L, FF, H)
        "hp": jnp.stack(hp),                                    # (L, 6, H)
    }


# --------------------------------- forward -----------------------------------
@jax.jit
def llm_forward(params, input_ids, attention_mask):
    # TODO(synk): the HF tokenizer (text -> input_ids) and pretrained-checkpoint
    # loading have no Pallas equivalent; token ids are synthetic and the
    # embedding gather stays as plain-JAX glue outside the kernel.
    x = params["tok_emb"][input_ids] + params["pos_emb"][None, :, :]   # (B, S, H)
    x = x.astype(jnp.float32).reshape(B * S, H)     # free layout-plumbing reshape

    # Additive block-diagonal mask over the flattened (B*S) key axis:
    # 0 where the key is a real token of the SAME batch element, -1e9 otherwise.
    keep = attention_mask.astype(jnp.float32)                           # (B, S)
    same = jnp.eye(B, dtype=jnp.float32)                                # (Bq, Bk)
    valid = same[:, :, None] * keep[None, :, :]                         # (Bq, Bk, Sk)
    valid = jnp.broadcast_to(valid[:, None, :, :], (B, S, B, S))
    add_mask = ((1.0 - valid) * -1e9).reshape(B * S, B * S)

    return llm_pallas_forward(params, x, add_mask)                      # (B, OUT)


if __name__ == "__main__":
    key = jax.random.PRNGKey(0)
    pkey, ikey = jax.random.split(key)

    params = init_params(pkey)

    input_ids = jax.random.randint(ikey, (B, S), 0, VOCAB, dtype=jnp.int32)
    # attention mask: first example fully attended, second has 2 padded tokens
    attention_mask = jnp.array([[1] * S, [1] * (S - 2) + [0, 0]], dtype=jnp.int32)

    out = llm_forward(params, input_ids, attention_mask)
    out = jax.block_until_ready(out)

    assert out.shape == (B, OUT), out.shape
    assert jnp.all(jnp.isfinite(out))
    print("KERNEL_OK")
</pallas_src>

<mosaic_0001>
module attributes {stable_mosaic.version = 11 : i64} {
  func.func @llm_fwd_kernel(%arg0: memref<16x32xf32, #tpu.memory_space<vmem>>, %arg1: memref<16x16xf32, #tpu.memory_space<vmem>>, %arg2: memref<2x3x2x32x16xbf16, #tpu.memory_space<vmem>>, %arg3: memref<2x3x2x1x16xf32, #tpu.memory_space<vmem>>, %arg4: memref<2x2x16x32xbf16, #tpu.memory_space<vmem>>, %arg5: memref<2x32x64xbf16, #tpu.memory_space<vmem>>, %arg6: memref<2x1x64xf32, #tpu.memory_space<vmem>>, %arg7: memref<2x64x32xbf16, #tpu.memory_space<vmem>>, %arg8: memref<2x6x32xf32, #tpu.memory_space<vmem>>, %arg9: memref<32x3xbf16, #tpu.memory_space<vmem>>, %arg10: memref<1x3xf32, #tpu.memory_space<vmem>>, %arg11: memref<2x3xf32, #tpu.memory_space<vmem>>, %arg12: memref<16x32xf32, #tpu.memory_space<vmem>>) attributes {dimension_semantics = [], scalar_prefetch = 0 : i64, scratch_operands = 1 : i64, tpu.core_type = #tpu.core_type<tc>} {
    %c0 = arith.constant 0 : index
    %c0_0 = arith.constant 0 : index
    %0 = vector.load %arg0[%c0, %c0_0] : memref<16x32xf32, #tpu.memory_space<vmem>>, vector<16x32xf32>
    %c0_1 = arith.constant 0 : index
    %c0_2 = arith.constant 0 : index
    %1 = vector.load %arg1[%c0_1, %c0_2] : memref<16x16xf32, #tpu.memory_space<vmem>>, vector<16x16xf32>
    %c0_3 = arith.constant 0 : index
    %c0_4 = arith.constant 0 : index
    %c0_5 = arith.constant 0 : index
    %2 = vector.load %arg8[%c0_3, %c0_4, %c0_5] : memref<2x6x32xf32, #tpu.memory_space<vmem>>, vector<1x6x32xf32>
    %3 = vector.shape_cast %2 : vector<1x6x32xf32> to vector<6x32xf32>
    %4 = vector.extract_strided_slice %3 {offsets = [0, 0], sizes = [1, 32], strides = [1, 1]} : vector<6x32xf32> to vector<1x32xf32>
    %5 = vector.extract_strided_slice %3 {offsets = [1, 0], sizes = [1, 32], strides = [1, 1]} : vector<6x32xf32> to vector<1x32xf32>
    %6 = vector.extract_strided_slice %3 {offsets = [2, 0], sizes = [1, 32], strides = [1, 1]} : vector<6x32xf32> to vector<1x32xf32>
    %7 = vector.extract_strided_slice %3 {offsets = [3, 0], sizes = [1, 32], strides = [1, 1]} : vector<6x32xf32> to vector<1x32xf32>
    %8 = vector.extract_strided_slice %3 {offsets = [4, 0], sizes = [1, 32], strides = [1, 1]} : vector<6x32xf32> to vector<1x32xf32>
    %9 = vector.extract_strided_slice %3 {offsets = [5, 0], sizes = [1, 32], strides = [1, 1]} : vector<6x32xf32> to vector<1x32xf32>
    %10 = arith.truncf %0 : vector<16x32xf32> to vector<16x32xbf16>
    %c0_6 = arith.constant 0 : index
    %c0_7 = arith.constant 0 : index
    %c0_8 = arith.constant 0 : index
    %c0_9 = arith.constant 0 : index
    %c0_10 = arith.constant 0 : index
    %11 = vector.load %arg2[%c0_6, %c0_7, %c0_8, %c0_9, %c0_10] : memref<2x3x2x32x16xbf16, #tpu.memory_space<vmem>>, vector<1x1x1x32x16xbf16>
    %12 = vector.shape_cast %11 : vector<1x1x1x32x16xbf16> to vector<32x16xbf16>
    %cst = arith.constant dense<0.000000e+00> : vector<16x16xf32>
    %13 = tpu.matmul %10, %12, %cst {dimension_numbers = #tpu.dot_dimension_numbers<[1], [0], [0], [1], [0, 0, 1, 1], [], []>} : vector<16x32xbf16>, vector<32x16xbf16>, vector<16x16xf32> -> vector<16x16xf32>
    %c0_11 = arith.constant 0 : index
    %c0_12 = arith.constant 0 : index
    %c0_13 = arith.constant 0 : index
    %c0_14 = arith.constant 0 : index
    %c0_15 = arith.constant 0 : index
    %14 = vector.load %arg3[%c0_11, %c0_12, %c0_13, %c0_14, %c0_15] : memref<2x3x2x1x16xf32, #tpu.memory_space<vmem>>, vector<1x1x1x1x16xf32>
    %15 = vector.shape_cast %14 : vector<1x1x1x1x16xf32> to vector<1x16xf32>
    %16 = vector.broadcast %15 : vector<1x16xf32> to vector<16x16xf32>
    %17 = arith.addf %13, %16 : vector<16x16xf32>
    %18 = arith.truncf %17 : vector<16x16xf32> to vector<16x16xbf16>
    %c0_16 = arith.constant 0 : index
    %c1 = arith.constant 1 : index
    %c0_17 = arith.constant 0 : index
    %c0_18 = arith.constant 0 : index
    %c0_19 = arith.constant 0 : index
    %19 = vector.load %arg2[%c0_16, %c1, %c0_17, %c0_18, %c0_19] : memref<2x3x2x32x16xbf16, #tpu.memory_space<vmem>>, vector<1x1x1x32x16xbf16>
    %20 = vector.shape_cast %19 : vector<1x1x1x32x16xbf16> to vector<32x16xbf16>
    %cst_20 = arith.constant dense<0.000000e+00> : vector<16x16xf32>
    %21 = tpu.matmul %10, %20, %cst_20 {dimension_numbers = #tpu.dot_dimension_numbers<[1], [0], [0], [1], [0, 0, 1, 1], [], []>} : vector<16x32xbf16>, vector<32x16xbf16>, vector<16x16xf32> -> vector<16x16xf32>
    %c0_21 = arith.constant 0 : index
    %c1_22 = arith.constant 1 : index
    %c0_23 = arith.constant 0 : index
    %c0_24 = arith.constant 0 : index
    %c0_25 = arith.constant 0 : index
    %22 = vector.load %arg3[%c0_21, %c1_22, %c0_23, %c0_24, %c0_25] : memref<2x3x2x1x16xf32, #tpu.memory_space<vmem>>, vector<1x1x1x1x16xf32>
    %23 = vector.shape_cast %22 : vector<1x1x1x1x16xf32> to vector<1x16xf32>
    %24 = vector.broadcast %23 : vector<1x16xf32> to vector<16x16xf32>
    %25 = arith.addf %21, %24 : vector<16x16xf32>
    %26 = arith.truncf %25 : vector<16x16xf32> to vector<16x16xbf16>
    %c0_26 = arith.constant 0 : index
    %c2 = arith.constant 2 : index
    %c0_27 = arith.constant 0 : index
    %c0_28 = arith.constant 0 : index
    %c0_29 = arith.constant 0 : index
    %27 = vector.load %arg2[%c0_26, %c2, %c0_27, %c0_28, %c0_29] : memref<2x3x2x32x16xbf16, #tpu.memory_space<vmem>>, vector<1x1x1x32x16xbf16>
    %28 = vector.shape_cast %27 : vector<1x1x1x32x16xbf16> to vector<32x16xbf16>
    %cst_30 = arith.constant dense<0.000000e+00> : vector<16x16xf32>
    %29 = tpu.matmul %10, %28, %cst_30 {dimension_numbers = #tpu.dot_dimension_numbers<[1], [0], [0], [1], [0, 0, 1, 1], [], []>} : vector<16x32xbf16>, vector<32x16xbf16>, vector<16x16xf32> -> vector<16x16xf32>
    %c0_31 = arith.constant 0 : index
    %c2_32 = arith.constant 2 : index
    %c0_33 = arith.constant 0 : index
    %c0_34 = arith.constant 0 : index
    %c0_35 = arith.constant 0 : index
    %30 = vector.load %arg3[%c0_31, %c2_32, %c0_33, %c0_34, %c0_35] : memref<2x3x2x1x16xf32, #tpu.memory_space<vmem>>, vector<1x1x1x1x16xf32>
    %31 = vector.shape_cast %30 : vector<1x1x1x1x16xf32> to vector<1x16xf32>
    %32 = vector.broadcast %31 : vector<1x16xf32> to vector<16x16xf32>
    %33 = arith.addf %29, %32 : vector<16x16xf32>
    %34 = arith.truncf %33 : vector<16x16xf32> to vector<16x16xbf16>
    %cst_36 = arith.constant dense<0.000000e+00> : vector<16x16xf32>
    %35 = tpu.matmul %18, %26, %cst_36 {dimension_numbers = #tpu.dot_dimension_numbers<[1], [1], [0], [0], [0, 0, 1, 0], [], []>} : vector<16x16xbf16>, vector<16x16xbf16>, vector<16x16xf32> -> vector<16x16xf32>
    %36 = arith.addf %35, %1 : vector<16x16xf32>
    %cst_37 = arith.constant dense<0xFF800000> : vector<16xf32>
    %37 = vector.multi_reduction <maximumf>, %36, %cst_37 [1] : vector<16x16xf32> to vector<16xf32>
    %38 = vector.shape_cast %37 : vector<16xf32> to vector<16x1xf32>
    %39 = vector.broadcast %38 : vector<16x1xf32> to vector<16x16xf32>
    %40 = arith.subf %36, %39 : vector<16x16xf32>
    %41 = math.exp %40 : vector<16x16xf32>
    %cst_38 = arith.constant dense<0.000000e+00> : vector<16xf32>
    %42 = vector.multi_reduction <add>, %41, %cst_38 [1] : vector<16x16xf32> to vector<16xf32>
    %43 = vector.shape_cast %42 : vector<16xf32> to vector<16x1xf32>
    %44 = tpu.reciprocal %43 {approx = true} : vector<16x1xf32> -> vector<16x1xf32>
    %45 = vector.broadcast %44 : vector<16x1xf32> to vector<16x16xf32>
    %46 = arith.mulf %41, %45 : vector<16x16xf32>
    %47 = arith.truncf %46 : vector<16x16xf32> to vector<16x16xbf16>
    %cst_39 = arith.constant dense<0.000000e+00> : vector<16x16xf32>
    %48 = tpu.matmul %47, %34, %cst_39 {dimension_numbers = #tpu.dot_dimension_numbers<[1], [0], [0], [1], [0, 0, 1, 1], [], []>} : vector<16x16xbf16>, vector<16x16xbf16>, vector<16x16xf32> -> vector<16x16xf32>
    %49 = arith.truncf %48 : vector<16x16xf32> to vector<16x16xbf16>
    %c0_40 = arith.constant 0 : index
    %c0_41 = arith.constant 0 : index
    %c0_42 = arith.constant 0 : index
    %c0_43 = arith.constant 0 : index
    %50 = vector.load %arg4[%c0_40, %c0_41, %c0_42, %c0_43] : memref<2x2x16x32xbf16, #tpu.memory_space<vmem>>, vector<1x1x16x32xbf16>
    %51 = vector.shape_cast %50 : vector<1x1x16x32xbf16> to vector<16x32xbf16>
    %cst_44 = arith.constant dense<0.000000e+00> : vector<16x32xf32>
    %52 = tpu.matmul %49, %51, %cst_44 {dimension_numbers = #tpu.dot_dimension_numbers<[1], [0], [0], [1], [0, 0, 1, 1], [], []>} : vector<16x16xbf16>, vector<16x32xbf16>, vector<16x32xf32> -> vector<16x32xf32>
    %c0_45 = arith.constant 0 : index
    %c0_46 = arith.constant 0 : index
    %c1_47 = arith.constant 1 : index
    %c0_48 = arith.constant 0 : index
    %c0_49 = arith.constant 0 : index
    %53 = vector.load %arg2[%c0_45, %c0_46, %c1_47, %c0_48, %c0_49] : memref<2x3x2x32x16xbf16, #tpu.memory_space<vmem>>, vector<1x1x1x32x16xbf16>
    %54 = vector.shape_cast %53 : vector<1x1x1x32x16xbf16> to vector<32x16xbf16>
    %cst_50 = arith.constant dense<0.000000e+00> : vector<16x16xf32>
    %55 = tpu.matmul %10, %54, %cst_50 {dimension_numbers = #tpu.dot_dimension_numbers<[1], [0], [0], [1], [0, 0, 1, 1], [], []>} : vector<16x32xbf16>, vector<32x16xbf16>, vector<16x16xf32> -> vector<16x16xf32>
    %c0_51 = arith.constant 0 : index
    %c0_52 = arith.constant 0 : index
    %c1_53 = arith.constant 1 : index
    %c0_54 = arith.constant 0 : index
    %c0_55 = arith.constant 0 : index
    %56 = vector.load %arg3[%c0_51, %c0_52, %c1_53, %c0_54, %c0_55] : memref<2x3x2x1x16xf32, #tpu.memory_space<vmem>>, vector<1x1x1x1x16xf32>
    %57 = vector.shape_cast %56 : vector<1x1x1x1x16xf32> to vector<1x16xf32>
    %58 = vector.broadcast %57 : vector<1x16xf32> to vector<16x16xf32>
    %59 = arith.addf %55, %58 : vector<16x16xf32>
    %60 = arith.truncf %59 : vector<16x16xf32> to vector<16x16xbf16>
    %c0_56 = arith.constant 0 : index
    %c1_57 = arith.constant 1 : index
    %c1_58 = arith.constant 1 : index
    %c0_59 = arith.constant 0 : index
    %c0_60 = arith.constant 0 : index
    %61 = vector.load %arg2[%c0_56, %c1_57, %c1_58, %c0_59, %c0_60] : memref<2x3x2x32x16xbf16, #tpu.memory_space<vmem>>, vector<1x1x1x32x16xbf16>
    %62 = vector.shape_cast %61 : vector<1x1x1x32x16xbf16> to vector<32x16xbf16>
    %cst_61 = arith.constant dense<0.000000e+00> : vector<16x16xf32>
    %63 = tpu.matmul %10, %62, %cst_61 {dimension_numbers = #tpu.dot_dimension_numbers<[1], [0], [0], [1], [0, 0, 1, 1], [], []>} : vector<16x32xbf16>, vector<32x16xbf16>, vector<16x16xf32> -> vector<16x16xf32>
    %c0_62 = arith.constant 0 : index
    %c1_63 = arith.constant 1 : index
    %c1_64 = arith.constant 1 : index
    %c0_65 = arith.constant 0 : index
    %c0_66 = arith.constant 0 : index
    %64 = vector.load %arg3[%c0_62, %c1_63, %c1_64, %c0_65, %c0_66] : memref<2x3x2x1x16xf32, #tpu.memory_space<vmem>>, vector<1x1x1x1x16xf32>
    %65 = vector.shape_cast %64 : vector<1x1x1x1x16xf32> to vector<1x16xf32>
    %66 = vector.broadcast %65 : vector<1x16xf32> to vector<16x16xf32>
    %67 = arith.addf %63, %66 : vector<16x16xf32>
    %68 = arith.truncf %67 : vector<16x16xf32> to vector<16x16xbf16>
    %c0_67 = arith.constant 0 : index
    %c2_68 = arith.constant 2 : index
    %c1_69 = arith.constant 1 : index
    %c0_70 = arith.constant 0 : index
    %c0_71 = arith.constant 0 : index
    %69 = vector.load %arg2[%c0_67, %c2_68, %c1_69, %c0_70, %c0_71] : memref<2x3x2x32x16xbf16, #tpu.memory_space<vmem>>, vector<1x1x1x32x16xbf16>
    %70 = vector.shape_cast %69 : vector<1x1x1x32x16xbf16> to vector<32x16xbf16>
    %cst_72 = arith.constant dense<0.000000e+00> : vector<16x16xf32>
    %71 = tpu.matmul %10, %70, %cst_72 {dimension_numbers = #tpu.dot_dimension_numbers<[1], [0], [0], [1], [0, 0, 1, 1], [], []>} : vector<16x32xbf16>, vector<32x16xbf16>, vector<16x16xf32> -> vector<16x16xf32>
    %c0_73 = arith.constant 0 : index
    %c2_74 = arith.constant 2 : index
    %c1_75 = arith.constant 1 : index
    %c0_76 = arith.constant 0 : index
    %c0_77 = arith.constant 0 : index
    %72 = vector.load %arg3[%c0_73, %c2_74, %c1_75, %c0_76, %c0_77] : memref<2x3x2x1x16xf32, #tpu.memory_space<vmem>>, vector<1x1x1x1x16xf32>
    %73 = vector.shape_cast %72 : vector<1x1x1x1x16xf32> to vector<1x16xf32>
    %74 = vector.broadcast %73 : vector<1x16xf32> to vector<16x16xf32>
    %75 = arith.addf %71, %74 : vector<16x16xf32>
    %76 = arith.truncf %75 : vector<16x16xf32> to vector<16x16xbf16>
    %cst_78 = arith.constant dense<0.000000e+00> : vector<16x16xf32>
    %77 = tpu.matmul %60, %68, %cst_78 {dimension_numbers = #tpu.dot_dimension_numbers<[1], [1], [0], [0], [0, 0, 1, 0], [], []>} : vector<16x16xbf16>, vector<16x16xbf16>, vector<16x16xf32> -> vector<16x16xf32>
    %78 = arith.addf %77, %1 : vector<16x16xf32>
    %cst_79 = arith.constant dense<0xFF800000> : vector<16xf32>
    %79 = vector.multi_reduction <maximumf>, %78, %cst_79 [1] : vector<16x16xf32> to vector<16xf32>
    %80 = vector.shape_cast %79 : vector<16xf32> to vector<16x1xf32>
    %81 = vector.broadcast %80 : vector<16x1xf32> to vector<16x16xf32>
    %82 = arith.subf %78, %81 : vector<16x16xf32>
    %83 = math.exp %82 : vector<16x16xf32>
    %cst_80 = arith.constant dense<0.000000e+00> : vector<16xf32>
    %84 = vector.multi_reduction <add>, %83, %cst_80 [1] : vector<16x16xf32> to vector<16xf32>
    %85 = vector.shape_cast %84 : vector<16xf32> to vector<16x1xf32>
    %86 = tpu.reciprocal %85 {approx = true} : vector<16x1xf32> -> vector<16x1xf32>
    %87 = vector.broadcast %86 : vector<16x1xf32> to vector<16x16xf32>
    %88 = arith.mulf %83, %87 : vector<16x16xf32>
    %89 = arith.truncf %88 : vector<16x16xf32> to vector<16x16xbf16>
    %cst_81 = arith.constant dense<0.000000e+00> : vector<16x16xf32>
    %90 = tpu.matmul %89, %76, %cst_81 {dimension_numbers = #tpu.dot_dimension_numbers<[1], [0], [0], [1], [0, 0, 1, 1], [], []>} : vector<16x16xbf16>, vector<16x16xbf16>, vector<16x16xf32> -> vector<16x16xf32>
    %91 = arith.truncf %90 : vector<16x16xf32> to vector<16x16xbf16>
    %c0_82 = arith.constant 0 : index
    %c1_83 = arith.constant 1 : index
    %c0_84 = arith.constant 0 : index
    %c0_85 = arith.constant 0 : index
    %92 = vector.load %arg4[%c0_82, %c1_83, %c0_84, %c0_85] : memref<2x2x16x32xbf16, #tpu.memory_space<vmem>>, vector<1x1x16x32xbf16>
    %93 = vector.shape_cast %92 : vector<1x1x16x32xbf16> to vector<16x32xbf16>
    %cst_86 = arith.constant dense<0.000000e+00> : vector<16x32xf32>
    %94 = tpu.matmul %91, %93, %cst_86 {dimension_numbers = #tpu.dot_dimension_numbers<[1], [0], [0], [1], [0, 0, 1, 1], [], []>} : vector<16x16xbf16>, vector<16x32xbf16>, vector<16x32xf32> -> vector<16x32xf32>
    %95 = arith.addf %52, %94 : vector<16x32xf32>
    %96 = arith.addf %0, %95 : vector<16x32xf32>
    %97 = vector.broadcast %4 : vector<1x32xf32> to vector<16x32xf32>
    %98 = arith.addf %96, %97 : vector<16x32xf32>
    %cst_87 = arith.constant dense<0.000000e+00> : vector<16xf32>
    %99 = vector.multi_reduction <add>, %98, %cst_87 [1] : vector<16x32xf32> to vector<16xf32>
    %100 = vector.shape_cast %99 : vector<16xf32> to vector<16x1xf32>
    %cst_88 = arith.constant 3.200000e+01 : f32
    %101 = vector.broadcast %cst_88 : f32 to vector<16x1xf32>
    %102 = arith.divf %100, %101 : vector<16x1xf32>
    %103 = vector.broadcast %102 : vector<16x1xf32> to vector<16x32xf32>
    %104 = arith.subf %98, %103 : vector<16x32xf32>
    %105 = arith.mulf %104, %104 : vector<16x32xf32>
    %cst_89 = arith.constant dense<0.000000e+00> : vector<16xf32>
    %106 = vector.multi_reduction <add>, %105, %cst_89 [1] : vector<16x32xf32> to vector<16xf32>
    %107 = vector.shape_cast %106 : vector<16xf32> to vector<16x1xf32>
    %cst_90 = arith.constant 3.200000e+01 : f32
    %108 = vector.broadcast %cst_90 : f32 to vector<16x1xf32>
    %109 = arith.divf %107, %108 : vector<16x1xf32>
    %cst_91 = arith.constant 9.99999974E-6 : f32
    %110 = vector.broadcast %cst_91 : f32 to vector<16x1xf32>
    %111 = arith.addf %109, %110 : vector<16x1xf32>
    %112 = math.rsqrt %111 : vector<16x1xf32>
    %113 = vector.broadcast %112 : vector<16x1xf32> to vector<16x32xf32>
    %114 = arith.mulf %104, %113 : vector<16x32xf32>
    %115 = vector.broadcast %5 : vector<1x32xf32> to vector<16x32xf32>
    %116 = arith.mulf %114, %115 : vector<16x32xf32>
    %117 = vector.broadcast %6 : vector<1x32xf32> to vector<16x32xf32>
    %118 = arith.addf %116, %117 : vector<16x32xf32>
    %119 = arith.truncf %118 : vector<16x32xf32> to vector<16x32xbf16>
    %c0_92 = arith.constant 0 : index
    %c0_93 = arith.constant 0 : index
    %c0_94 = arith.constant 0 : index
    %120 = vector.load %arg5[%c0_92, %c0_93, %c0_94] : memref<2x32x64xbf16, #tpu.memory_space<vmem>>, vector<1x32x64xbf16>
    %121 = vector.shape_cast %120 : vector<1x32x64xbf16> to vector<32x64xbf16>
    %cst_95 = arith.constant dense<0.000000e+00> : vector<16x64xf32>
    %122 = tpu.matmul %119, %121, %cst_95 {dimension_numbers = #tpu.dot_dimension_numbers<[1], [0], [0], [1], [0, 0, 1, 1], [], []>} : vector<16x32xbf16>, vector<32x64xbf16>, vector<16x64xf32> -> vector<16x64xf32>
    %c0_96 = arith.constant 0 : index
    %c0_97 = arith.constant 0 : index
    %c0_98 = arith.constant 0 : index
    %123 = vector.load %arg6[%c0_96, %c0_97, %c0_98] : memref<2x1x64xf32, #tpu.memory_space<vmem>>, vector<1x1x64xf32>
    %124 = vector.shape_cast %123 : vector<1x1x64xf32> to vector<1x64xf32>
    %125 = vector.broadcast %124 : vector<1x64xf32> to vector<16x64xf32>
    %126 = arith.addf %122, %125 : vector<16x64xf32>
    %cst_99 = arith.constant 5.000000e-01 : f32
    %127 = vector.broadcast %cst_99 : f32 to vector<16x64xf32>
    %128 = arith.mulf %127, %126 : vector<16x64xf32>
    %cst_100 = arith.constant 4.471500e-02 : f32
    %129 = vector.broadcast %cst_100 : f32 to vector<16x64xf32>
    %130 = arith.mulf %129, %126 : vector<16x64xf32>
    %131 = arith.mulf %130, %126 : vector<16x64xf32>
    %132 = arith.mulf %131, %126 : vector<16x64xf32>
    %133 = arith.addf %126, %132 : vector<16x64xf32>
    %cst_101 = arith.constant 0.797884583 : f32
    %134 = vector.broadcast %cst_101 : f32 to vector<16x64xf32>
    %135 = arith.mulf %134, %133 : vector<16x64xf32>
    %136 = math.tanh %135 : vector<16x64xf32>
    %cst_102 = arith.constant 1.000000e+00 : f32
    %137 = vector.broadcast %cst_102 : f32 to vector<16x64xf32>
    %138 = arith.addf %137, %136 : vector<16x64xf32>
    %139 = arith.mulf %128, %138 : vector<16x64xf32>
    %140 = arith.truncf %139 : vector<16x64xf32> to vector<16x64xbf16>
    %c0_103 = arith.constant 0 : index
    %c0_104 = arith.constant 0 : index
    %c0_105 = arith.constant 0 : index
    %141 = vector.load %arg7[%c0_103, %c0_104, %c0_105] : memref<2x64x32xbf16, #tpu.memory_space<vmem>>, vector<1x64x32xbf16>
    %142 = vector.shape_cast %141 : vector<1x64x32xbf16> to vector<64x32xbf16>
    %cst_106 = arith.constant dense<0.000000e+00> : vector<16x32xf32>
    %143 = tpu.matmul %140, %142, %cst_106 {dimension_numbers = #tpu.dot_dimension_numbers<[1], [0], [0], [1], [0, 0, 1, 1], [], []>} : vector<16x64xbf16>, vector<64x32xbf16>, vector<16x32xf32> -> vector<16x32xf32>
    %144 = vector.broadcast %7 : vector<1x32xf32> to vector<16x32xf32>
    %145 = arith.addf %143, %144 : vector<16x32xf32>
    %146 = arith.addf %118, %145 : vector<16x32xf32>
    %cst_107 = arith.constant dense<0.000000e+00> : vector<16xf32>
    %147 = vector.multi_reduction <add>, %146, %cst_107 [1] : vector<16x32xf32> to vector<16xf32>
    %148 = vector.shape_cast %147 : vector<16xf32> to vector<16x1xf32>
    %cst_108 = arith.constant 3.200000e+01 : f32
    %149 = vector.broadcast %cst_108 : f32 to vector<16x1xf32>
    %150 = arith.divf %148, %149 : vector<16x1xf32>
    %151 = vector.broadcast %150 : vector<16x1xf32> to vector<16x32xf32>
    %152 = arith.subf %146, %151 : vector<16x32xf32>
    %153 = arith.mulf %152, %152 : vector<16x32xf32>
    %cst_109 = arith.constant dense<0.000000e+00> : vector<16xf32>
    %154 = vector.multi_reduction <add>, %153, %cst_109 [1] : vector<16x32xf32> to vector<16xf32>
    %155 = vector.shape_cast %154 : vector<16xf32> to vector<16x1xf32>
    %cst_110 = arith.constant 3.200000e+01 : f32
    %156 = vector.broadcast %cst_110 : f32 to vector<16x1xf32>
    %157 = arith.divf %155, %156 : vector<16x1xf32>
    %cst_111 = arith.constant 9.99999974E-6 : f32
    %158 = vector.broadcast %cst_111 : f32 to vector<16x1xf32>
    %159 = arith.addf %157, %158 : vector<16x1xf32>
    %160 = math.rsqrt %159 : vector<16x1xf32>
    %161 = vector.broadcast %160 : vector<16x1xf32> to vector<16x32xf32>
    %162 = arith.mulf %152, %161 : vector<16x32xf32>
    %163 = vector.broadcast %8 : vector<1x32xf32> to vector<16x32xf32>
    %164 = arith.mulf %162, %163 : vector<16x32xf32>
    %165 = vector.broadcast %9 : vector<1x32xf32> to vector<16x32xf32>
    %166 = arith.addf %164, %165 : vector<16x32xf32>
    %c1_112 = arith.constant 1 : index
    %c0_113 = arith.constant 0 : index
    %c0_114 = arith.constant 0 : index
    %167 = vector.load %arg8[%c1_112, %c0_113, %c0_114] : memref<2x6x32xf32, #tpu.memory_space<vmem>>, vector<1x6x32xf32>
    %168 = vector.shape_cast %167 : vector<1x6x32xf32> to vector<6x32xf32>
    %169 = vector.extract_strided_slice %168 {offsets = [0, 0], sizes = [1, 32], strides = [1, 1]} : vector<6x32xf32> to vector<1x32xf32>
    %170 = vector.extract_strided_slice %168 {offsets = [1, 0], sizes = [1, 32], strides = [1, 1]} : vector<6x32xf32> to vector<1x32xf32>
    %171 = vector.extract_strided_slice %168 {offsets = [2, 0], sizes = [1, 32], strides = [1, 1]} : vector<6x32xf32> to vector<1x32xf32>
    %172 = vector.extract_strided_slice %168 {offsets = [3, 0], sizes = [1, 32], strides = [1, 1]} : vector<6x32xf32> to vector<1x32xf32>
    %173 = vector.extract_strided_slice %168 {offsets = [4, 0], sizes = [1, 32], strides = [1, 1]} : vector<6x32xf32> to vector<1x32xf32>
    %174 = vector.extract_strided_slice %168 {offsets = [5, 0], sizes = [1, 32], strides = [1, 1]} : vector<6x32xf32> to vector<1x32xf32>
    %175 = arith.truncf %166 : vector<16x32xf32> to vector<16x32xbf16>
    %c1_115 = arith.constant 1 : index
    %c0_116 = arith.constant 0 : index
    %c0_117 = arith.constant 0 : index
    %c0_118 = arith.constant 0 : index
    %c0_119 = arith.constant 0 : index
    %176 = vector.load %arg2[%c1_115, %c0_116, %c0_117, %c0_118, %c0_119] : memref<2x3x2x32x16xbf16, #tpu.memory_space<vmem>>, vector<1x1x1x32x16xbf16>
    %177 = vector.shape_cast %176 : vector<1x1x1x32x16xbf16> to vector<32x16xbf16>
    %cst_120 = arith.constant dense<0.000000e+00> : vector<16x16xf32>
    %178 = tpu.matmul %175, %177, %cst_120 {dimension_numbers = #tpu.dot_dimension_numbers<[1], [0], [0], [1], [0, 0, 1, 1], [], []>} : vector<16x32xbf16>, vector<32x16xbf16>, vector<16x16xf32> -> vector<16x16xf32>
    %c1_121 = arith.constant 1 : index
    %c0_122 = arith.constant 0 : index
    %c0_123 = arith.constant 0 : index
    %c0_124 = arith.constant 0 : index
    %c0_125 = arith.constant 0 : index
    %179 = vector.load %arg3[%c1_121, %c0_122, %c0_123, %c0_124, %c0_125] : memref<2x3x2x1x16xf32, #tpu.memory_space<vmem>>, vector<1x1x1x1x16xf32>
    %180 = vector.shape_cast %179 : vector<1x1x1x1x16xf32> to vector<1x16xf32>
    %181 = vector.broadcast %180 : vector<1x16xf32> to vector<16x16xf32>
    %182 = arith.addf %178, %181 : vector<16x16xf32>
    %183 = arith.truncf %182 : vector<16x16xf32> to vector<16x16xbf16>
    %c1_126 = arith.constant 1 : index
    %c1_127 = arith.constant 1 : index
    %c0_128 = arith.constant 0 : index
    %c0_129 = arith.constant 0 : index
    %c0_130 = arith.constant 0 : index
    %184 = vector.load %arg2[%c1_126, %c1_127, %c0_128, %c0_129, %c0_130] : memref<2x3x2x32x16xbf16, #tpu.memory_space<vmem>>, vector<1x1x1x32x16xbf16>
    %185 = vector.shape_cast %184 : vector<1x1x1x32x16xbf16> to vector<32x16xbf16>
    %cst_131 = arith.constant dense<0.000000e+00> : vector<16x16xf32>
    %186 = tpu.matmul %175, %185, %cst_131 {dimension_numbers = #tpu.dot_dimension_numbers<[1], [0], [0], [1], [0, 0, 1, 1], [], []>} : vector<16x32xbf16>, vector<32x16xbf16>, vector<16x16xf32> -> vector<16x16xf32>
    %c1_132 = arith.constant 1 : index
    %c1_133 = arith.constant 1 : index
    %c0_134 = arith.constant 0 : index
    %c0_135 = arith.constant 0 : index
    %c0_136 = arith.constant 0 : index
    %187 = vector.load %arg3[%c1_132, %c1_133, %c0_134, %c0_135, %c0_136] : memref<2x3x2x1x16xf32, #tpu.memory_space<vmem>>, vector<1x1x1x1x16xf32>
    %188 = vector.shape_cast %187 : vector<1x1x1x1x16xf32> to vector<1x16xf32>
    %189 = vector.broadcast %188 : vector<1x16xf32> to vector<16x16xf32>
    %190 = arith.addf %186, %189 : vector<16x16xf32>
    %191 = arith.truncf %190 : vector<16x16xf32> to vector<16x16xbf16>
    %c1_137 = arith.constant 1 : index
    %c2_138 = arith.constant 2 : index
    %c0_139 = arith.constant 0 : index
    %c0_140 = arith.constant 0 : index
    %c0_141 = arith.constant 0 : index
    %192 = vector.load %arg2[%c1_137, %c2_138, %c0_139, %c0_140, %c0_141] : memref<2x3x2x32x16xbf16, #tpu.memory_space<vmem>>, vector<1x1x1x32x16xbf16>
    %193 = vector.shape_cast %192 : vector<1x1x1x32x16xbf16> to vector<32x16xbf16>
    %cst_142 = arith.constant dense<0.000000e+00> : vector<16x16xf32>
    %194 = tpu.matmul %175, %193, %cst_142 {dimension_numbers = #tpu.dot_dimension_numbers<[1], [0], [0], [1], [0, 0, 1, 1], [], []>} : vector<16x32xbf16>, vector<32x16xbf16>, vector<16x16xf32> -> vector<16x16xf32>
    %c1_143 = arith.constant 1 : index
    %c2_144 = arith.constant 2 : index
    %c0_145 = arith.constant 0 : index
    %c0_146 = arith.constant 0 : index
    %c0_147 = arith.constant 0 : index
    %195 = vector.load %arg3[%c1_143, %c2_144, %c0_145, %c0_146, %c0_147] : memref<2x3x2x1x16xf32, #tpu.memory_space<vmem>>, vector<1x1x1x1x16xf32>
    %196 = vector.shape_cast %195 : vector<1x1x1x1x16xf32> to vector<1x16xf32>
    %197 = vector.broadcast %196 : vector<1x16xf32> to vector<16x16xf32>
    %198 = arith.addf %194, %197 : vector<16x16xf32>
    %199 = arith.truncf %198 : vector<16x16xf32> to vector<16x16xbf16>
    %cst_148 = arith.constant dense<0.000000e+00> : vector<16x16xf32>
    %200 = tpu.matmul %183, %191, %cst_148 {dimension_numbers = #tpu.dot_dimension_numbers<[1], [1], [0], [0], [0, 0, 1, 0], [], []>} : vector<16x16xbf16>, vector<16x16xbf16>, vector<16x16xf32> -> vector<16x16xf32>
    %201 = arith.addf %200, %1 : vector<16x16xf32>
    %cst_149 = arith.constant dense<0xFF800000> : vector<16xf32>
    %202 = vector.multi_reduction <maximumf>, %201, %cst_149 [1] : vector<16x16xf32> to vector<16xf32>
    %203 = vector.shape_cast %202 : vector<16xf32> to vector<16x1xf32>
    %204 = vector.broadcast %203 : vector<16x1xf32> to vector<16x16xf32>
    %205 = arith.subf %201, %204 : vector<16x16xf32>
    %206 = math.exp %205 : vector<16x16xf32>
    %cst_150 = arith.constant dense<0.000000e+00> : vector<16xf32>
    %207 = vector.multi_reduction <add>, %206, %cst_150 [1] : vector<16x16xf32> to vector<16xf32>
    %208 = vector.shape_cast %207 : vector<16xf32> to vector<16x1xf32>
    %209 = tpu.reciprocal %208 {approx = true} : vector<16x1xf32> -> vector<16x1xf32>
    %210 = vector.broadcast %209 : vector<16x1xf32> to vector<16x16xf32>
    %211 = arith.mulf %206, %210 : vector<16x16xf32>
    %212 = arith.truncf %211 : vector<16x16xf32> to vector<16x16xbf16>
    %cst_151 = arith.constant dense<0.000000e+00> : vector<16x16xf32>
    %213 = tpu.matmul %212, %199, %cst_151 {dimension_numbers = #tpu.dot_dimension_numbers<[1], [0], [0], [1], [0, 0, 1, 1], [], []>} : vector<16x16xbf16>, vector<16x16xbf16>, vector<16x16xf32> -> vector<16x16xf32>
    %214 = arith.truncf %213 : vector<16x16xf32> to vector<16x16xbf16>
    %c1_152 = arith.constant 1 : index
    %c0_153 = arith.constant 0 : index
    %c0_154 = arith.constant 0 : index
    %c0_155 = arith.constant 0 : index
    %215 = vector.load %arg4[%c1_152, %c0_153, %c0_154, %c0_155] : memref<2x2x16x32xbf16, #tpu.memory_space<vmem>>, vector<1x1x16x32xbf16>
    %216 = vector.shape_cast %215 : vector<1x1x16x32xbf16> to vector<16x32xbf16>
    %cst_156 = arith.constant dense<0.000000e+00> : vector<16x32xf32>
    %217 = tpu.matmul %214, %216, %cst_156 {dimension_numbers = #tpu.dot_dimension_numbers<[1], [0], [0], [1], [0, 0, 1, 1], [], []>} : vector<16x16xbf16>, vector<16x32xbf16>, vector<16x32xf32> -> vector<16x32xf32>
    %c1_157 = arith.constant 1 : index
    %c0_158 = arith.constant 0 : index
    %c1_159 = arith.constant 1 : index
    %c0_160 = arith.constant 0 : index
    %c0_161 = arith.constant 0 : index
    %218 = vector.load %arg2[%c1_157, %c0_158, %c1_159, %c0_160, %c0_161] : memref<2x3x2x32x16xbf16, #tpu.memory_space<vmem>>, vector<1x1x1x32x16xbf16>
    %219 = vector.shape_cast %218 : vector<1x1x1x32x16xbf16> to vector<32x16xbf16>
    %cst_162 = arith.constant dense<0.000000e+00> : vector<16x16xf32>
    %220 = tpu.matmul %175, %219, %cst_162 {dimension_numbers = #tpu.dot_dimension_numbers<[1], [0], [0], [1], [0, 0, 1, 1], [], []>} : vector<16x32xbf16>, vector<32x16xbf16>, vector<16x16xf32> -> vector<16x16xf32>
    %c1_163 = arith.constant 1 : index
    %c0_164 = arith.constant 0 : index
    %c1_165 = arith.constant 1 : index
    %c0_166 = arith.constant 0 : index
    %c0_167 = arith.constant 0 : index
    %221 = vector.load %arg3[%c1_163, %c0_164, %c1_165, %c0_166, %c0_167] : memref<2x3x2x1x16xf32, #tpu.memory_space<vmem>>, vector<1x1x1x1x16xf32>
    %222 = vector.shape_cast %221 : vector<1x1x1x1x16xf32> to vector<1x16xf32>
    %223 = vector.broadcast %222 : vector<1x16xf32> to vector<16x16xf32>
    %224 = arith.addf %220, %223 : vector<16x16xf32>
    %225 = arith.truncf %224 : vector<16x16xf32> to vector<16x16xbf16>
    %c1_168 = arith.constant 1 : index
    %c1_169 = arith.constant 1 : index
    %c1_170 = arith.constant 1 : index
    %c0_171 = arith.constant 0 : index
    %c0_172 = arith.constant 0 : index
    %226 = vector.load %arg2[%c1_168, %c1_169, %c1_170, %c0_171, %c0_172] : memref<2x3x2x32x16xbf16, #tpu.memory_space<vmem>>, vector<1x1x1x32x16xbf16>
    %227 = vector.shape_cast %226 : vector<1x1x1x32x16xbf16> to vector<32x16xbf16>
    %cst_173 = arith.constant dense<0.000000e+00> : vector<16x16xf32>
    %228 = tpu.matmul %175, %227, %cst_173 {dimension_numbers = #tpu.dot_dimension_numbers<[1], [0], [0], [1], [0, 0, 1, 1], [], []>} : vector<16x32xbf16>, vector<32x16xbf16>, vector<16x16xf32> -> vector<16x16xf32>
    %c1_174 = arith.constant 1 : index
    %c1_175 = arith.constant 1 : index
    %c1_176 = arith.constant 1 : index
    %c0_177 = arith.constant 0 : index
    %c0_178 = arith.constant 0 : index
    %229 = vector.load %arg3[%c1_174, %c1_175, %c1_176, %c0_177, %c0_178] : memref<2x3x2x1x16xf32, #tpu.memory_space<vmem>>, vector<1x1x1x1x16xf32>
    %230 = vector.shape_cast %229 : vector<1x1x1x1x16xf32> to vector<1x16xf32>
    %231 = vector.broadcast %230 : vector<1x16xf32> to vector<16x16xf32>
    %232 = arith.addf %228, %231 : vector<16x16xf32>
    %233 = arith.truncf %232 : vector<16x16xf32> to vector<16x16xbf16>
    %c1_179 = arith.constant 1 : index
    %c2_180 = arith.constant 2 : index
    %c1_181 = arith.constant 1 : index
    %c0_182 = arith.constant 0 : index
    %c0_183 = arith.constant 0 : index
    %234 = vector.load %arg2[%c1_179, %c2_180, %c1_181, %c0_182, %c0_183] : memref<2x3x2x32x16xbf16, #tpu.memory_space<vmem>>, vector<1x1x1x32x16xbf16>
    %235 = vector.shape_cast %234 : vector<1x1x1x32x16xbf16> to vector<32x16xbf16>
    %cst_184 = arith.constant dense<0.000000e+00> : vector<16x16xf32>
    %236 = tpu.matmul %175, %235, %cst_184 {dimension_numbers = #tpu.dot_dimension_numbers<[1], [0], [0], [1], [0, 0, 1, 1], [], []>} : vector<16x32xbf16>, vector<32x16xbf16>, vector<16x16xf32> -> vector<16x16xf32>
    %c1_185 = arith.constant 1 : index
    %c2_186 = arith.constant 2 : index
    %c1_187 = arith.constant 1 : index
    %c0_188 = arith.constant 0 : index
    %c0_189 = arith.constant 0 : index
    %237 = vector.load %arg3[%c1_185, %c2_186, %c1_187, %c0_188, %c0_189] : memref<2x3x2x1x16xf32, #tpu.memory_space<vmem>>, vector<1x1x1x1x16xf32>
    %238 = vector.shape_cast %237 : vector<1x1x1x1x16xf32> to vector<1x16xf32>
    %239 = vector.broadcast %238 : vector<1x16xf32> to vector<16x16xf32>
    %240 = arith.addf %236, %239 : vector<16x16xf32>
    %241 = arith.truncf %240 : vector<16x16xf32> to vector<16x16xbf16>
    %cst_190 = arith.constant dense<0.000000e+00> : vector<16x16xf32>
    %242 = tpu.matmul %225, %233, %cst_190 {dimension_numbers = #tpu.dot_dimension_numbers<[1], [1], [0], [0], [0, 0, 1, 0], [], []>} : vector<16x16xbf16>, vector<16x16xbf16>, vector<16x16xf32> -> vector<16x16xf32>
    %243 = arith.addf %242, %1 : vector<16x16xf32>
    %cst_191 = arith.constant dense<0xFF800000> : vector<16xf32>
    %244 = vector.multi_reduction <maximumf>, %243, %cst_191 [1] : vector<16x16xf32> to vector<16xf32>
    %245 = vector.shape_cast %244 : vector<16xf32> to vector<16x1xf32>
    %246 = vector.broadcast %245 : vector<16x1xf32> to vector<16x16xf32>
    %247 = arith.subf %243, %246 : vector<16x16xf32>
    %248 = math.exp %247 : vector<16x16xf32>
    %cst_192 = arith.constant dense<0.000000e+00> : vector<16xf32>
    %249 = vector.multi_reduction <add>, %248, %cst_192 [1] : vector<16x16xf32> to vector<16xf32>
    %250 = vector.shape_cast %249 : vector<16xf32> to vector<16x1xf32>
    %251 = tpu.reciprocal %250 {approx = true} : vector<16x1xf32> -> vector<16x1xf32>
    %252 = vector.broadcast %251 : vector<16x1xf32> to vector<16x16xf32>
    %253 = arith.mulf %248, %252 : vector<16x16xf32>
    %254 = arith.truncf %253 : vector<16x16xf32> to vector<16x16xbf16>
    %cst_193 = arith.constant dense<0.000000e+00> : vector<16x16xf32>
    %255 = tpu.matmul %254, %241, %cst_193 {dimension_numbers = #tpu.dot_dimension_numbers<[1], [0], [0], [1], [0, 0, 1, 1], [], []>} : vector<16x16xbf16>, vector<16x16xbf16>, vector<16x16xf32> -> vector<16x16xf32>
    %256 = arith.truncf %255 : vector<16x16xf32> to vector<16x16xbf16>
    %c1_194 = arith.constant 1 : index
    %c1_195 = arith.constant 1 : index
    %c0_196 = arith.constant 0 : index
    %c0_197 = arith.constant 0 : index
    %257 = vector.load %arg4[%c1_194, %c1_195, %c0_196, %c0_197] : memref<2x2x16x32xbf16, #tpu.memory_space<vmem>>, vector<1x1x16x32xbf16>
    %258 = vector.shape_cast %257 : vector<1x1x16x32xbf16> to vector<16x32xbf16>
    %cst_198 = arith.constant dense<0.000000e+00> : vector<16x32xf32>
    %259 = tpu.matmul %256, %258, %cst_198 {dimension_numbers = #tpu.dot_dimension_numbers<[1], [0], [0], [1], [0, 0, 1, 1], [], []>} : vector<16x16xbf16>, vector<16x32xbf16>, vector<16x32xf32> -> vector<16x32xf32>
    %260 = arith.addf %217, %259 : vector<16x32xf32>
    %261 = arith.addf %166, %260 : vector<16x32xf32>
    %262 = vector.broadcast %169 : vector<1x32xf32> to vector<16x32xf32>
    %263 = arith.addf %261, %262 : vector<16x32xf32>
    %cst_199 = arith.constant dense<0.000000e+00> : vector<16xf32>
    %264 = vector.multi_reduction <add>, %263, %cst_199 [1] : vector<16x32xf32> to vector<16xf32>
    %265 = vector.shape_cast %264 : vector<16xf32> to vector<16x1xf32>
    %cst_200 = arith.constant 3.200000e+01 : f32
    %266 = vector.broadcast %cst_200 : f32 to vector<16x1xf32>
    %267 = arith.divf %265, %266 : vector<16x1xf32>
    %268 = vector.broadcast %267 : vector<16x1xf32> to vector<16x32xf32>
    %269 = arith.subf %263, %268 : vector<16x32xf32>
    %270 = arith.mulf %269, %269 : vector<16x32xf32>
    %cst_201 = arith.constant dense<0.000000e+00> : vector<16xf32>
    %271 = vector.multi_reduction <add>, %270, %cst_201 [1] : vector<16x32xf32> to vector<16xf32>
    %272 = vector.shape_cast %271 : vector<16xf32> to vector<16x1xf32>
    %cst_202 = arith.constant 3.200000e+01 : f32
    %273 = vector.broadcast %cst_202 : f32 to vector<16x1xf32>
    %274 = arith.divf %272, %273 : vector<16x1xf32>
    %cst_203 = arith.constant 9.99999974E-6 : f32
    %275 = vector.broadcast %cst_203 : f32 to vector<16x1xf32>
    %276 = arith.addf %274, %275 : vector<16x1xf32>
    %277 = math.rsqrt %276 : vector<16x1xf32>
    %278 = vector.broadcast %277 : vector<16x1xf32> to vector<16x32xf32>
    %279 = arith.mulf %269, %278 : vector<16x32xf32>
    %280 = vector.broadcast %170 : vector<1x32xf32> to vector<16x32xf32>
    %281 = arith.mulf %279, %280 : vector<16x32xf32>
    %282 = vector.broadcast %171 : vector<1x32xf32> to vector<16x32xf32>
    %283 = arith.addf %281, %282 : vector<16x32xf32>
    %284 = arith.truncf %283 : vector<16x32xf32> to vector<16x32xbf16>
    %c1_204 = arith.constant 1 : index
    %c0_205 = arith.constant 0 : index
    %c0_206 = arith.constant 0 : index
    %285 = vector.load %arg5[%c1_204, %c0_205, %c0_206] : memref<2x32x64xbf16, #tpu.memory_space<vmem>>, vector<1x32x64xbf16>
    %286 = vector.shape_cast %285 : vector<1x32x64xbf16> to vector<32x64xbf16>
    %cst_207 = arith.constant dense<0.000000e+00> : vector<16x64xf32>
    %287 = tpu.matmul %284, %286, %cst_207 {dimension_numbers = #tpu.dot_dimension_numbers<[1], [0], [0], [1], [0, 0, 1, 1], [], []>} : vector<16x32xbf16>, vector<32x64xbf16>, vector<16x64xf32> -> vector<16x64xf32>
    %c1_208 = arith.constant 1 : index
    %c0_209 = arith.constant 0 : index
    %c0_210 = arith.constant 0 : index
    %288 = vector.load %arg6[%c1_208, %c0_209, %c0_210] : memref<2x1x64xf32, #tpu.memory_space<vmem>>, vector<1x1x64xf32>
    %289 = vector.shape_cast %288 : vector<1x1x64xf32> to vector<1x64xf32>
    %290 = vector.broadcast %289 : vector<1x64xf32> to vector<16x64xf32>
    %291 = arith.addf %287, %290 : vector<16x64xf32>
    %cst_211 = arith.constant 5.000000e-01 : f32
    %292 = vector.broadcast %cst_211 : f32 to vector<16x64xf32>
    %293 = arith.mulf %292, %291 : vector<16x64xf32>
    %cst_212 = arith.constant 4.471500e-02 : f32
    %294 = vector.broadcast %cst_212 : f32 to vector<16x64xf32>
    %295 = arith.mulf %294, %291 : vector<16x64xf32>
    %296 = arith.mulf %295, %291 : vector<16x64xf32>
    %297 = arith.mulf %296, %291 : vector<16x64xf32>
    %298 = arith.addf %291, %297 : vector<16x64xf32>
    %cst_213 = arith.constant 0.797884583 : f32
    %299 = vector.broadcast %cst_213 : f32 to vector<16x64xf32>
    %300 = arith.mulf %299, %298 : vector<16x64xf32>
    %301 = math.tanh %300 : vector<16x64xf32>
    %cst_214 = arith.constant 1.000000e+00 : f32
    %302 = vector.broadcast %cst_214 : f32 to vector<16x64xf32>
    %303 = arith.addf %302, %301 : vector<16x64xf32>
    %304 = arith.mulf %293, %303 : vector<16x64xf32>
    %305 = arith.truncf %304 : vector<16x64xf32> to vector<16x64xbf16>
    %c1_215 = arith.constant 1 : index
    %c0_216 = arith.constant 0 : index
    %c0_217 = arith.constant 0 : index
    %306 = vector.load %arg7[%c1_215, %c0_216, %c0_217] : memref<2x64x32xbf16, #tpu.memory_space<vmem>>, vector<1x64x32xbf16>
    %307 = vector.shape_cast %306 : vector<1x64x32xbf16> to vector<64x32xbf16>
    %cst_218 = arith.constant dense<0.000000e+00> : vector<16x32xf32>
    %308 = tpu.matmul %305, %307, %cst_218 {dimension_numbers = #tpu.dot_dimension_numbers<[1], [0], [0], [1], [0, 0, 1, 1], [], []>} : vector<16x64xbf16>, vector<64x32xbf16>, vector<16x32xf32> -> vector<16x32xf32>
    %309 = vector.broadcast %172 : vector<1x32xf32> to vector<16x32xf32>
    %310 = arith.addf %308, %309 : vector<16x32xf32>
    %311 = arith.addf %283, %310 : vector<16x32xf32>
    %cst_219 = arith.constant dense<0.000000e+00> : vector<16xf32>
    %312 = vector.multi_reduction <add>, %311, %cst_219 [1] : vector<16x32xf32> to vector<16xf32>
    %313 = vector.shape_cast %312 : vector<16xf32> to vector<16x1xf32>
    %cst_220 = arith.constant 3.200000e+01 : f32
    %314 = vector.broadcast %cst_220 : f32 to vector<16x1xf32>
    %315 = arith.divf %313, %314 : vector<16x1xf32>
    %316 = vector.broadcast %315 : vector<16x1xf32> to vector<16x32xf32>
    %317 = arith.subf %311, %316 : vector<16x32xf32>
    %318 = arith.mulf %317, %317 : vector<16x32xf32>
    %cst_221 = arith.constant dense<0.000000e+00> : vector<16xf32>
    %319 = vector.multi_reduction <add>, %318, %cst_221 [1] : vector<16x32xf32> to vector<16xf32>
    %320 = vector.shape_cast %319 : vector<16xf32> to vector<16x1xf32>
    %cst_222 = arith.constant 3.200000e+01 : f32
    %321 = vector.broadcast %cst_222 : f32 to vector<16x1xf32>
    %322 = arith.divf %320, %321 : vector<16x1xf32>
    %cst_223 = arith.constant 9.99999974E-6 : f32
    %323 = vector.broadcast %cst_223 : f32 to vector<16x1xf32>
    %324 = arith.addf %322, %323 : vector<16x1xf32>
    %325 = math.rsqrt %324 : vector<16x1xf32>
    %326 = vector.broadcast %325 : vector<16x1xf32> to vector<16x32xf32>
    %327 = arith.mulf %317, %326 : vector<16x32xf32>
    %328 = vector.broadcast %173 : vector<1x32xf32> to vector<16x32xf32>
    %329 = arith.mulf %327, %328 : vector<16x32xf32>
    %330 = vector.broadcast %174 : vector<1x32xf32> to vector<16x32xf32>
    %331 = arith.addf %329, %330 : vector<16x32xf32>
    %c0_224 = arith.constant 0 : index
    %c0_225 = arith.constant 0 : index
    %332 = vector.load %arg12[%c0_224, %c0_225] : memref<16x32xf32, #tpu.memory_space<vmem>>, vector<16x32xf32>
    tpu.vector_store %arg12[%c0_224, %c0_225], %331 {strides = array<i32>} : memref<16x32xf32, #tpu.memory_space<vmem>>, vector<16x32xf32>,
    %c0_226 = arith.constant 0 : index
    %c0_227 = arith.constant 0 : index
    %333 = tpu.strided_load %arg12[%c0_226, %c0_227] {strides = array<i32: 8, 1>} : memref<16x32xf32, #tpu.memory_space<vmem>>, vector<2x32xf32>
    %334 = arith.truncf %333 : vector<2x32xf32> to vector<2x32xbf16>
    %c0_228 = arith.constant 0 : index
    %c0_229 = arith.constant 0 : index
    %335 = vector.load %arg9[%c0_228, %c0_229] : memref<32x3xbf16, #tpu.memory_space<vmem>>, vector<32x3xbf16>
    %cst_230 = arith.constant dense<0.000000e+00> : vector<2x3xf32>
    %336 = tpu.matmul %334, %335, %cst_230 {dimension_numbers = #tpu.dot_dimension_numbers<[1], [0], [0], [1], [0, 0, 1, 1], [], []>} : vector<2x32xbf16>, vector<32x3xbf16>, vector<2x3xf32> -> vector<2x3xf32>
    %c0_231 = arith.constant 0 : index
    %c0_232 = arith.constant 0 : index
    %337 = vector.load %arg10[%c0_231, %c0_232] : memref<1x3xf32, #tpu.memory_space<vmem>>, vector<1x3xf32>
    %338 = vector.broadcast %337 : vector<1x3xf32> to vector<2x3xf32>
    %339 = arith.addf %336, %338 : vector<2x3xf32>
    %c0_233 = arith.constant 0 : index
    %c0_234 = arith.constant 0 : index
    %340 = vector.load %arg11[%c0_233, %c0_234] : memref<2x3xf32, #tpu.memory_space<vmem>>, vector<2x3xf32>
    tpu.vector_store %arg11[%c0_233, %c0_234], %339 {strides = array<i32>} : memref<2x3xf32, #tpu.memory_space<vmem>>, vector<2x3xf32>,
    return
  }
}

</mosaic_0001>

<llo_original>
// kernel: llm_forward.1
$region0: #{llm_forward.1}
  #allocation0 [shape = 'u32[]', space=smem, size = 0x4, offset = 0x4, fixed_abs, tag = 'smem constant byte address 0x4 - core index']
  #allocation1 [shape = 'u32[144,128]{1,0:T(1,128)}', space=vmem, size = 0x12000, scoped, tag = 'internal scratch']
  #allocation2 [shape = 'f32[16,32]{1,0:T(8,128)}', space=vmem, size = 0x2000, scoped, tag = 'scratch operand']
  %s0 = inlined_call_operand.vmem [shape: f32[16,32], index: 0, kind: input, shape index: {}]
  %s1 = inlined_call_operand.vmem [shape: f32[16,16], index: 1, kind: input, shape index: {}]
  %s2 = inlined_call_operand.vmem [shape: bf16[2,3,2,32,16], index: 2, kind: input, shape index: {}]
  %s3 = inlined_call_operand.vmem [shape: f32[2,3,2,1,16], index: 3, kind: input, shape index: {}]
  %s4 = inlined_call_operand.vmem [shape: bf16[2,2,16,32], index: 4, kind: input, shape index: {}]
  %s5 = inlined_call_operand.vmem [shape: bf16[2,32,64], index: 5, kind: input, shape index: {}]
  %s6 = inlined_call_operand.vmem [shape: f32[2,1,64], index: 6, kind: input, shape index: {}]
  %s7 = inlined_call_operand.vmem [shape: bf16[2,64,32], index: 7, kind: input, shape index: {}]
  %s8 = inlined_call_operand.vmem [shape: f32[2,6,32], index: 8, kind: input, shape index: {}]
  %s9 = inlined_call_operand.vmem [shape: bf16[32,3], index: 9, kind: input, shape index: {}]
  %s10 = inlined_call_operand.vmem [shape: f32[1,3], index: 10, kind: input, shape index: {}]
  %s11 = inlined_call_operand.hbm [shape: f32[2,3], index: 11, kind: output, shape index: {}]
  %s12 = sld [smem:[#allocation0]]
  $region54: #{llm_forward.1} parent=0
    _
  %s14 = ssub.s32 1, %s12
  %s15 = scalar_select 0, %s14, %s12
  $region1: #{llm_forward.1} parent=0
    #allocation3 [shape = 'u8[1024]{0}', space=vmem, size = 0x400, scoped, tag = 'output window, operand 0, single buffered']
    #allocation4 [shape = 's32[1]{0}', space=sflag, size = 0x4, scoped, tag = 'scoped memory for llm_forward.1']
    %16 = vsyncpa [#allocation4], 0
    // Predicated region
    $region2: #{llm_forward.1} parent=1 // pred_check
      _
    $region3: #{llm_forward.1} parent=1 // pred_check_branch
      %18 = sbr.rel (0) target = $region5
    $region4: #{llm_forward.1} parent=1 // pred_region
      _
    $region5: #{llm_forward.1} parent=1 // pred_fallthru
      _
    // Predicated region
    $region6: #{llm_forward.1} parent=1 // pred_check
      _
    $region7: #{llm_forward.1} parent=1 // pred_check_branch
      %20 = sbr.rel (0) target = $region9
    $region8: #{llm_forward.1} parent=1 // pred_region
      _
    $region9: #{llm_forward.1} parent=1 // pred_fallthru
      _
    // Predicated region
    $region10: #{llm_forward.1} parent=1 // pred_check
      _
    $region11: #{llm_forward.1} parent=1 // pred_check_branch
      %22 = sbr.rel (0) target = $region13
    $region12: #{llm_forward.1} parent=1 // pred_region
      _
    $region13: #{llm_forward.1} parent=1 // pred_fallthru
      _
    // Predicated region
    $region14: #{llm_forward.1} parent=1 // pred_check
      _
    $region15: #{llm_forward.1} parent=1 // pred_check_branch
      %24 = sbr.rel (0) target = $region17
    $region16: #{llm_forward.1} parent=1 // pred_region
      _
    $region17: #{llm_forward.1} parent=1 // pred_fallthru
      _
    // Predicated region
    $region18: #{llm_forward.1} parent=1 // pred_check
      _
    $region19: #{llm_forward.1} parent=1 // pred_check_branch
      %26 = sbr.rel (0) target = $region21
    $region20: #{llm_forward.1} parent=1 // pred_region
      _
    $region21: #{llm_forward.1} parent=1 // pred_fallthru
      _
    // Predicated region
    $region22: #{llm_forward.1} parent=1 // pred_check
      _
    $region23: #{llm_forward.1} parent=1 // pred_check_branch
      %28 = sbr.rel (0) target = $region25
    $region24: #{llm_forward.1} parent=1 // pred_region
      _
    $region25: #{llm_forward.1} parent=1 // pred_fallthru
      _
    // Predicated region
    $region26: #{llm_forward.1} parent=1 // pred_check
      _
    $region27: #{llm_forward.1} parent=1 // pred_check_branch
      %30 = sbr.rel (0) target = $region29
    $region28: #{llm_forward.1} parent=1 // pred_region
      _
    $region29: #{llm_forward.1} parent=1 // pred_fallthru
      _
    // Predicated region
    $region30: #{llm_forward.1} parent=1 // pred_check
      _
    $region31: #{llm_forward.1} parent=1 // pred_check_branch
      %32 = sbr.rel (0) target = $region33
    $region32: #{llm_forward.1} parent=1 // pred_region
      _
    $region33: #{llm_forward.1} parent=1 // pred_fallthru
      _
    // Predicated region
    $region34: #{llm_forward.1} parent=1 // pred_check
      _
    $region35: #{llm_forward.1} parent=1 // pred_check_branch
      %34 = sbr.rel (0) target = $region37
    $region36: #{llm_forward.1} parent=1 // pred_region
      _
    $region37: #{llm_forward.1} parent=1 // pred_fallthru
      _
    // Predicated region
    $region38: #{llm_forward.1} parent=1 // pred_check
      _
    $region39: #{llm_forward.1} parent=1 // pred_check_branch
      %36 = sbr.rel (0) target = $region41
    $region40: #{llm_forward.1} parent=1 // pred_region
      _
    $region41: #{llm_forward.1} parent=1 // pred_fallthru
      _
    // Predicated region
    $region42: #{llm_forward.1} parent=1 // pred_check
      _
    $region43: #{llm_forward.1} parent=1 // pred_check_branch
      %38 = sbr.rel (0) target = $region45
    $region44: #{llm_forward.1} parent=1 // pred_region
      _
    $region45: #{llm_forward.1} parent=1 // pred_fallthru
      _
    %v40 = vld [vmem:[%s0] sm:$0xff]
    %v41 = vld [vmem:[%s0 + $0x8] sm:$0xff]
    %v42 = vld [vmem:[%s1] sm:$0xff]
    %v43 = vld [vmem:[%s1 + $0x8] sm:$0xff]
    %v44 = vld [vmem:[%s8] sm:$0x3f]
    %v45 = vpack.c.bf16 %v41, %v40
    %v46 = vld [vmem:[%s2] sm:$0xf]
    %v47 = vld [vmem:[%s2 + $0x4] sm:$0xf]
    %v48 = vld [vmem:[%s2 + $0x8] sm:$0xf]
    %v49 = vld [vmem:[%s2 + $0xc] sm:$0xf]
    %v50 = vld [vmem:[%s3] sm:$0x1]
    %v52 = vlaneseq
    %v53 = vshrl.u32 %v52, 7
    %v54 = vsub.s32 0, %v53
    %v55 = vrot.slane %v50, %v54
    %v61 = vunpack.c.l.b16 %v46
    %v62 = vunpack.c.l.b16 %v47
    %v63 = vunpack.c.l.b16 %v48
    %v64 = vunpack.c.l.b16 %v49
    %v65 = vpack.c.b16 %v62, %v61
    %v66 = vpack.c.b16 %v64, %v63
    %vm69 = vcmask 261120
    %v71 = vsel %vm69, %v45, 0
    %73 = vmatprep.subr.bf16.mxu0 0
    %74 = vmatpush1.bf16.msra.mxu0 0
    %75 = vmatprep.subr.bf16.mxu0 0
    %76 = vmatpush1.bf16.msra.mxu0 0
    %77 = vmatprep.subr.bf16.mxu0 0
    %78 = vmatpush1.bf16.msra.mxu0 0
    %79 = vmatprep.subr.bf16.mxu0 0
    %80 = vmatpush1.bf16.msra.mxu0 0
    %81 = vmatprep.subr.bf16.mxu0 0
    %82 = vmatpush1.bf16.msra.mxu0 0
    %83 = vmatprep.subr.bf16.mxu0 0
    %84 = vmatpush1.bf16.msra.mxu0 0
    %85 = vmatprep.subr.bf16.mxu0 0
    %86 = vmatpush1.bf16.msra.mxu0 %v66
    %87 = vmatprep.subr.bf16.mxu0 0
    %88 = vmatpush1.bf16.msra.mxu0 %v65
    %89 = vmatprep.subr.bf16.mxu0 0
    %90 = vmatpush2.bf16.msra.mxu0 0
    %91 = vmatprep.subr.bf16.mxu0 0
    %92 = vmatpush2.bf16.msra.mxu0 0
    %93 = vmatprep.subr.bf16.mxu0 0
    %94 = vmatpush2.bf16.msra.mxu0 0
    %95 = vmatprep.subr.bf16.mxu0 0
    %96 = vmatpush2.bf16.msra.mxu0 0
    %97 = vmatprep.subr.bf16.mxu0 0
    %98 = vmatpush2.bf16.msra.mxu0 0
    %99 = vmatprep.subr.bf16.mxu0 0
    %100 = vmatpush2.bf16.msra.mxu0 0
    %101 = vmatprep.subr.bf16.mxu0 0
    %102 = vmatpush2.bf16.msra.mxu0 0
    %103 = vmatprep.subr.bf16.mxu0 0
    %104 = vmatpush2.bf16.msra.mxu0 0
    %105 = vmatprep.mubr.bf16.mxu0 0
    %106 = vmatmul.mubr.bf16.gmra.mxu0 %v71
    %v107 = vpop.f32.mrf.mxu0
    %v108 = vadd.f32 %v55, %v107
    %v109 = vpop.f32.mrf.mxu0
    %v110 = vpop.f32.mrf.mxu0
    %v111 = vadd.f32 %v55, %v110
    %v112 = vpop.f32.mrf.mxu0
    %113 = vdwg.mxu0
    %v114 = vpack.c.bf16 %v111, %v108
    %s115 = scalar_lea.vmem %s2, 32
    %v116 = vld [vmem:[%s115] sm:$0xf]
    %v117 = vld [vmem:[%s115 + $0x4] sm:$0xf]
    %v118 = vld [vmem:[%s115 + $0x8] sm:$0xf]
    %v119 = vld [vmem:[%s115 + $0xc] sm:$0xf]
    %s120 = scalar_lea.vmem %s3, 2
    %v121 = vld [vmem:[%s120] sm:$0x1]
    %v123 = vlaneseq
    %v124 = vshrl.u32 %v123, 7
    %v125 = vsub.s32 0, %v124
    %v126 = vrot.slane %v121, %v125
    %v132 = vunpack.c.l.b16 %v116
    %v133 = vunpack.c.l.b16 %v117
    %v134 = vunpack.c.l.b16 %v118
    %v135 = vunpack.c.l.b16 %v119
    %v136 = vpack.c.b16 %v133, %v132
    %v137 = vpack.c.b16 %v135, %v134
    %140 = vmatprep.subr.bf16.mxu0 0
    %141 = vmatpush1.bf16.msra.mxu0 0
    %142 = vmatprep.subr.bf16.mxu0 0
    %143 = vmatpush1.bf16.msra.mxu0 0
    %144 = vmatprep.subr.bf16.mxu0 0
    %145 = vmatpush1.bf16.msra.mxu0 0
    %146 = vmatprep.subr.bf16.mxu0 0
    %147 = vmatpush1.bf16.msra.mxu0 0
    %148 = vmatprep.subr.bf16.mxu0 0
    %149 = vmatpush1.bf16.msra.mxu0 0
    %150 = vmatprep.subr.bf16.mxu0 0
    %151 = vmatpush1.bf16.msra.mxu0 0
    %152 = vmatprep.subr.bf16.mxu0 0
    %153 = vmatpush1.bf16.msra.mxu0 %v137
    %154 = vmatprep.subr.bf16.mxu0 0
    %155 = vmatpush1.bf16.msra.mxu0 %v136
    %156 = vmatprep.subr.bf16.mxu0 0
    %157 = vmatpush2.bf16.msra.mxu0 0
    %158 = vmatprep.subr.bf16.mxu0 0
    %159 = vmatpush2.bf16.msra.mxu0 0
    %160 = vmatprep.subr.bf16.mxu0 0
    %161 = vmatpush2.bf16.msra.mxu0 0
    %162 = vmatprep.subr.bf16.mxu0 0
    %163 = vmatpush2.bf16.msra.mxu0 0
    %164 = vmatprep.subr.bf16.mxu0 0
    %165 = vmatpush2.bf16.msra.mxu0 0
    %166 = vmatprep.subr.bf16.mxu0 0
    %167 = vmatpush2.bf16.msra.mxu0 0
    %168 = vmatprep.subr.bf16.mxu0 0
    %169 = vmatpush2.bf16.msra.mxu0 0
    %170 = vmatprep.subr.bf16.mxu0 0
    %171 = vmatpush2.bf16.msra.mxu0 0
    %172 = vmatprep.mubr.bf16.mxu0 0
    %173 = vmatmul.mubr.bf16.gmra.mxu0 %v71
    %v174 = vpop.f32.mrf.mxu0
    %v175 = vadd.f32 %v126, %v174
    %v176 = vpop.f32.mrf.mxu0
    %v177 = vpop.f32.mrf.mxu0
    %v178 = vadd.f32 %v126, %v177
    %v179 = vpop.f32.mrf.mxu0
    %180 = vdwg.mxu0
    %v181 = vpack.c.bf16 %v178, %v175
    %s182 = scalar_lea.vmem %s2, 64
    %v183 = vld [vmem:[%s182] sm:$0xf]
    %v184 = vld [vmem:[%s182 + $0x4] sm:$0xf]
    %v185 = vld [vmem:[%s182 + $0x8] sm:$0xf]
    %v186 = vld [vmem:[%s182 + $0xc] sm:$0xf]
    %s187 = scalar_lea.vmem %s3, 4
    %v188 = vld [vmem:[%s187] sm:$0x1]
    %v190 = vlaneseq
    %v191 = vshrl.u32 %v190, 7
    %v192 = vsub.s32 0, %v191
    %v193 = vrot.slane %v188, %v192
    %v199 = vunpack.c.l.b16 %v183
    %v200 = vunpack.c.l.b16 %v184
    %v201 = vunpack.c.l.b16 %v185
    %v202 = vunpack.c.l.b16 %v186
    %v203 = vpack.c.b16 %v200, %v199
    %v204 = vpack.c.b16 %v202, %v201
    %207 = vmatprep.subr.bf16.mxu0 0
    %208 = vmatpush1.bf16.msra.mxu0 0
    %209 = vmatprep.subr.bf16.mxu0 0
    %210 = vmatpush1.bf16.msra.mxu0 0
    %211 = vmatprep.subr.bf16.mxu0 0
    %212 = vmatpush1.bf16.msra.mxu0 0
    %213 = vmatprep.subr.bf16.mxu0 0
    %214 = vmatpush1.bf16.msra.mxu0 0
    %215 = vmatprep.subr.bf16.mxu0 0
    %216 = vmatpush1.bf16.msra.mxu0 0
    %217 = vmatprep.subr.bf16.mxu0 0
    %218 = vmatpush1.bf16.msra.mxu0 0
    %219 = vmatprep.subr.bf16.mxu0 0
    %220 = vmatpush1.bf16.msra.mxu0 %v204
    %221 = vmatprep.subr.bf16.mxu0 0
    %222 = vmatpush1.bf16.msra.mxu0 %v203
    %223 = vmatprep.subr.bf16.mxu0 0
    %224 = vmatpush2.bf16.msra.mxu0 0
    %225 = vmatprep.subr.bf16.mxu0 0
    %226 = vmatpush2.bf16.msra.mxu0 0
    %227 = vmatprep.subr.bf16.mxu0 0
    %228 = vmatpush2.bf16.msra.mxu0 0
    %229 = vmatprep.subr.bf16.mxu0 0
    %230 = vmatpush2.bf16.msra.mxu0 0
    %231 = vmatprep.subr.bf16.mxu0 0
    %232 = vmatpush2.bf16.msra.mxu0 0
    %233 = vmatprep.subr.bf16.mxu0 0
    %234 = vmatpush2.bf16.msra.mxu0 0
    %235 = vmatprep.subr.bf16.mxu0 0
    %236 = vmatpush2.bf16.msra.mxu0 0
    %237 = vmatprep.subr.bf16.mxu0 0
    %238 = vmatpush2.bf16.msra.mxu0 0
    %239 = vmatprep.mubr.bf16.mxu0 0
    %240 = vmatmul.mubr.bf16.gmra.mxu0 %v71
    %v241 = vpop.f32.mrf.mxu0
    %v242 = vadd.f32 %v193, %v241
    %v243 = vpop.f32.mrf.mxu0
    %v244 = vpop.f32.mrf.mxu0
    %v245 = vadd.f32 %v193, %v244
    %v246 = vpop.f32.mrf.mxu0
    %247 = vdwg.mxu0
    %v248 = vpack.c.bf16 %v245, %v242
    %vm249 = vcmask 130048
    %v251 = vsel %vm249, %v114, 0
    %v254 = vsel %vm249, %v181, 0
    %256 = vmatprep.subr.bf16.mxu0 0
    %257 = vmatpush1.bf16.xpose.msra.mxu0 0
    %258 = vmatprep.subr.bf16.mxu0 0
    %259 = vmatpush1.bf16.xpose.msra.mxu0 0
    %260 = vmatprep.subr.bf16.mxu0 0
    %261 = vmatpush1.bf16.xpose.msra.mxu0 0
    %262 = vmatprep.subr.bf16.mxu0 0
    %263 = vmatpush1.bf16.xpose.msra.mxu0 0
    %264 = vmatprep.subr.bf16.mxu0 0
    %265 = vmatpush1.bf16.xpose.msra.mxu0 0
    %266 = vmatprep.subr.bf16.mxu0 0
    %267 = vmatpush1.bf16.xpose.msra.mxu0 0
    %268 = vmatprep.subr.bf16.mxu0 0
    %269 = vmatpush1.bf16.xpose.msra.mxu0 0
    %270 = vmatprep.subr.bf16.mxu0 0
    %271 = vmatpush1.bf16.xpose.msra.mxu0 %v254
    %272 = vmatprep.subr.bf16.mxu0 0
    %273 = vmatpush2.bf16.xpose.msra.mxu0 0
    %274 = vmatprep.subr.bf16.mxu0 0
    %275 = vmatpush2.bf16.xpose.msra.mxu0 0
    %276 = vmatprep.subr.bf16.mxu0 0
    %277 = vmatpush2.bf16.xpose.msra.mxu0 0
    %278 = vmatprep.subr.bf16.mxu0 0
    %279 = vmatpush2.bf16.xpose.msra.mxu0 0
    %280 = vmatprep.subr.bf16.mxu0 0
    %281 = vmatpush2.bf16.xpose.msra.mxu0 0
    %282 = vmatprep.subr.bf16.mxu0 0
    %283 = vmatpush2.bf16.xpose.msra.mxu0 0
    %284 = vmatprep.subr.bf16.mxu0 0
    %285 = vmatpush2.bf16.xpose.msra.mxu0 0
    %286 = vmatprep.subr.bf16.mxu0 0
    %287 = vmatpush2.bf16.xpose.msra.mxu0 0
    %288 = vmatprep.mubr.bf16.mxu0 0
    %289 = vmatmul.mubr.bf16.gmra.mxu0 %v251
    %v290 = vpop.f32.mrf.mxu0
    %v291 = vadd.f32 %v42, %v290
    %v292 = vpop.f32.mrf.mxu0
    %v293 = vpop.f32.mrf.mxu0
    %v294 = vadd.f32 %v43, %v293
    %v295 = vpop.f32.mrf.mxu0
    %296 = vdwg.mxu0
    %v297 = vsel %vm249, %v291, -inf
    %298 = vmax.xlane.f32.xlu0 %v297
    %v299 = vpop.xlane.xlu0 %298
    %v300 = vsel %vm249, %v294, -inf
    %301 = vmax.xlane.f32.xlu0 %v300
    %v302 = vpop.xlane.xlu0 %301
    %v303 = vsub.f32 %v291, %v299
    %v304 = vsub.f32 %v294, %v302
    %v305 = vmul.f32 %v303, 1.442695
    %v306 = vpow.pop %v305
    %v307 = vmul.f32 %v304, 1.442695
    %v308 = vpow.pop %v307
    %v309 = vsel %vm249, %v306, 0.0
    %310 = vadd.xlane.f32.xlu0 %v309
    %v311 = vpop.xlane.xlu0 %310
    %v312 = vsel %vm249, %v308, 0.0
    %313 = vadd.xlane.f32.xlu0 %v312
    %v314 = vpop.xlane.xlu0 %313
    %v315 = vrcp.pop %v311
    %v316 = vrcp.pop %v314
    %v317 = vmul.f32 %v306, %v315
    %v318 = vmul.f32 %v308, %v316
    %v319 = vpack.c.bf16 %v318, %v317
    %v321 = vsel %vm249, %v319, 0
    %323 = vmatprep.subr.bf16.mxu0 0
    %324 = vmatpush1.bf16.msra.mxu0 0
    %325 = vmatprep.subr.bf16.mxu0 0
    %326 = vmatpush1.bf16.msra.mxu0 0
    %327 = vmatprep.subr.bf16.mxu0 0
    %328 = vmatpush1.bf16.msra.mxu0 0
    %329 = vmatprep.subr.bf16.mxu0 0
    %330 = vmatpush1.bf16.msra.mxu0 0
    %331 = vmatprep.subr.bf16.mxu0 0
    %332 = vmatpush1.bf16.msra.mxu0 0
    %333 = vmatprep.subr.bf16.mxu0 0
    %334 = vmatpush1.bf16.msra.mxu0 0
    %335 = vmatprep.subr.bf16.mxu0 0
    %336 = vmatpush1.bf16.msra.mxu0 0
    %337 = vmatprep.subr.bf16.mxu0 0
    %338 = vmatpush1.bf16.msra.mxu0 %v248
    %339 = vmatprep.subr.bf16.mxu0 0
    %340 = vmatpush2.bf16.msra.mxu0 0
    %341 = vmatprep.subr.bf16.mxu0 0
    %342 = vmatpush2.bf16.msra.mxu0 0
    %343 = vmatprep.subr.bf16.mxu0 0
    %344 = vmatpush2.bf16.msra.mxu0 0
    %345 = vmatprep.subr.bf16.mxu0 0
    %346 = vmatpush2.bf16.msra.mxu0 0
    %347 = vmatprep.subr.bf16.mxu0 0
    %348 = vmatpush2.bf16.msra.mxu0 0
    %349 = vmatprep.subr.bf16.mxu0 0
    %350 = vmatpush2.bf16.msra.mxu0 0
    %351 = vmatprep.subr.bf16.mxu0 0
    %352 = vmatpush2.bf16.msra.mxu0 0
    %353 = vmatprep.subr.bf16.mxu0 0
    %354 = vmatpush2.bf16.msra.mxu0 0
    %355 = vmatprep.mubr.bf16.mxu0 0
    %356 = vmatmul.mubr.bf16.gmra.mxu0 %v321
    %v357 = vpop.f32.mrf.mxu0
    %v358 = vadd.f32 0.0, %v357
    %v359 = vpop.f32.mrf.mxu0
    %v360 = vpop.f32.mrf.mxu0
    %v361 = vadd.f32 0.0, %v360
    %v362 = vpop.f32.mrf.mxu0
    %363 = vdwg.mxu0
    %v364 = vpack.c.bf16 %v361, %v358
    %v365 = vld [vmem:[%s4] sm:$0xf]
    %v366 = vld [vmem:[%s4 + $0x4] sm:$0xf]
    %s367 = scalar_lea.vmem %s2, 16
    %v368 = vld [vmem:[%s367] sm:$0xf]
    %v369 = vld [vmem:[%s367 + $0x4] sm:$0xf]
    %v370 = vld [vmem:[%s367 + $0x8] sm:$0xf]
    %v371 = vld [vmem:[%s367 + $0xc] sm:$0xf]
    %s372 = scalar_lea.vmem %s3, 1
    %v373 = vld [vmem:[%s372] sm:$0x1]
    %v375 = vlaneseq
    %v376 = vshrl.u32 %v375, 7
    %v377 = vsub.s32 0, %v376
    %v378 = vrot.slane %v373, %v377
    %v384 = vunpack.c.l.b16 %v368
    %v385 = vunpack.c.l.b16 %v369
    %v386 = vunpack.c.l.b16 %v370
    %v387 = vunpack.c.l.b16 %v371
    %v388 = vpack.c.b16 %v385, %v384
    %v389 = vpack.c.b16 %v387, %v386
    %392 = vmatprep.subr.bf16.mxu0 0
    %393 = vmatpush1.bf16.msra.mxu0 0
    %394 = vmatprep.subr.bf16.mxu0 0
    %395 = vmatpush1.bf16.msra.mxu0 0
    %396 = vmatprep.subr.bf16.mxu0 0
    %397 = vmatpush1.bf16.msra.mxu0 0
    %398 = vmatprep.subr.bf16.mxu0 0
    %399 = vmatpush1.bf16.msra.mxu0 0
    %400 = vmatprep.subr.bf16.mxu0 0
    %401 = vmatpush1.bf16.msra.mxu0 0
    %402 = vmatprep.subr.bf16.mxu0 0
    %403 = vmatpush1.bf16.msra.mxu0 0
    %404 = vmatprep.subr.bf16.mxu0 0
    %405 = vmatpush1.bf16.msra.mxu0 %v389
    %406 = vmatprep.subr.bf16.mxu0 0
    %407 = vmatpush1.bf16.msra.mxu0 %v388
    %408 = vmatprep.subr.bf16.mxu0 0
    %409 = vmatpush2.bf16.msra.mxu0 0
    %410 = vmatprep.subr.bf16.mxu0 0
    %411 = vmatpush2.bf16.msra.mxu0 0
    %412 = vmatprep.subr.bf16.mxu0 0
    %413 = vmatpush2.bf16.msra.mxu0 0
    %414 = vmatprep.subr.bf16.mxu0 0
    %415 = vmatpush2.bf16.msra.mxu0 0
    %416 = vmatprep.subr.bf16.mxu0 0
    %417 = vmatpush2.bf16.msra.mxu0 0
    %418 = vmatprep.subr.bf16.mxu0 0
    %419 = vmatpush2.bf16.msra.mxu0 0
    %420 = vmatprep.subr.bf16.mxu0 0
    %421 = vmatpush2.bf16.msra.mxu0 0
    %422 = vmatprep.subr.bf16.mxu0 0
    %423 = vmatpush2.bf16.msra.mxu0 0
    %424 = vmatprep.mubr.bf16.mxu0 0
    %425 = vmatmul.mubr.bf16.gmra.mxu0 %v71
    %v426 = vpop.f32.mrf.mxu0
    %v427 = vadd.f32 %v378, %v426
    %v428 = vpop.f32.mrf.mxu0
    %v429 = vpop.f32.mrf.mxu0
    %v430 = vadd.f32 %v378, %v429
    %v431 = vpop.f32.mrf.mxu0
    %432 = vdwg.mxu0
    %v433 = vpack.c.bf16 %v430, %v427
    %s434 = scalar_lea.vmem %s2, 48
    %v435 = vld [vmem:[%s434] sm:$0xf]
    %v436 = vld [vmem:[%s434 + $0x4] sm:$0xf]
    %v437 = vld [vmem:[%s434 + $0x8] sm:$0xf]
    %v438 = vld [vmem:[%s434 + $0xc] sm:$0xf]
    %s439 = scalar_lea.vmem %s3, 3
    %v440 = vld [vmem:[%s439] sm:$0x1]
    %v442 = vlaneseq
    %v443 = vshrl.u32 %v442, 7
    %v444 = vsub.s32 0, %v443
    %v445 = vrot.slane %v440, %v444
    %v451 = vunpack.c.l.b16 %v435
    %v452 = vunpack.c.l.b16 %v436
    %v453 = vunpack.c.l.b16 %v437
    %v454 = vunpack.c.l.b16 %v438
    %v455 = vpack.c.b16 %v452, %v451
    %v456 = vpack.c.b16 %v454, %v453
    %459 = vmatprep.subr.bf16.mxu0 0
    %460 = vmatpush1.bf16.msra.mxu0 0
    %461 = vmatprep.subr.bf16.mxu0 0
    %462 = vmatpush1.bf16.msra.mxu0 0
    %463 = vmatprep.subr.bf16.mxu0 0
    %464 = vmatpush1.bf16.msra.mxu0 0
    %465 = vmatprep.subr.bf16.mxu0 0
    %466 = vmatpush1.bf16.msra.mxu0 0
    %467 = vmatprep.subr.bf16.mxu0 0
    %468 = vmatpush1.bf16.msra.mxu0 0
    %469 = vmatprep.subr.bf16.mxu0 0
    %470 = vmatpush1.bf16.msra.mxu0 0
    %471 = vmatprep.subr.bf16.mxu0 0
    %472 = vmatpush1.bf16.msra.mxu0 %v456
    %473 = vmatprep.subr.bf16.mxu0 0
    %474 = vmatpush1.bf16.msra.mxu0 %v455
    %475 = vmatprep.subr.bf16.mxu0 0
    %476 = vmatpush2.bf16.msra.mxu0 0
    %477 = vmatprep.subr.bf16.mxu0 0
    %478 = vmatpush2.bf16.msra.mxu0 0
    %479 = vmatprep.subr.bf16.mxu0 0
    %480 = vmatpush2.bf16.msra.mxu0 0
    %481 = vmatprep.subr.bf16.mxu0 0
    %482 = vmatpush2.bf16.msra.mxu0 0
    %483 = vmatprep.subr.bf16.mxu0 0
    %484 = vmatpush2.bf16.msra.mxu0 0
    %485 = vmatprep.subr.bf16.mxu0 0
    %486 = vmatpush2.bf16.msra.mxu0 0
    %487 = vmatprep.subr.bf16.mxu0 0
    %488 = vmatpush2.bf16.msra.mxu0 0
    %489 = vmatprep.subr.bf16.mxu0 0
    %490 = vmatpush2.bf16.msra.mxu0 0
    %491 = vmatprep.mubr.bf16.mxu0 0
    %492 = vmatmul.mubr.bf16.gmra.mxu0 %v71
    %v493 = vpop.f32.mrf.mxu0
    %v494 = vadd.f32 %v445, %v493
    %v495 = vpop.f32.mrf.mxu0
    %v496 = vpop.f32.mrf.mxu0
    %v497 = vadd.f32 %v445, %v496
    %v498 = vpop.f32.mrf.mxu0
    %499 = vdwg.mxu0
    %v500 = vpack.c.bf16 %v497, %v494
    %s501 = scalar_lea.vmem %s2, 80
    %v502 = vld [vmem:[%s501] sm:$0xf]
    %v503 = vld [vmem:[%s501 + $0x4] sm:$0xf]
    %v504 = vld [vmem:[%s501 + $0x8] sm:$0xf]
    %v505 = vld [vmem:[%s501 + $0xc] sm:$0xf]
    %s506 = scalar_lea.vmem %s3, 5
    %v507 = vld [vmem:[%s506] sm:$0x1]
    %v509 = vlaneseq
    %v510 = vshrl.u32 %v509, 7
    %v511 = vsub.s32 0, %v510
    %v512 = vrot.slane %v507, %v511
    %v518 = vunpack.c.l.b16 %v502
    %v519 = vunpack.c.l.b16 %v503
    %v520 = vunpack.c.l.b16 %v504
    %v521 = vunpack.c.l.b16 %v505
    %v522 = vpack.c.b16 %v519, %v518
    %v523 = vpack.c.b16 %v521, %v520
    %526 = vmatprep.subr.bf16.mxu0 0
    %527 = vmatpush1.bf16.msra.mxu0 0
    %528 = vmatprep.subr.bf16.mxu0 0
    %529 = vmatpush1.bf16.msra.mxu0 0
    %530 = vmatprep.subr.bf16.mxu0 0
    %531 = vmatpush1.bf16.msra.mxu0 0
    %532 = vmatprep.subr.bf16.mxu0 0
    %533 = vmatpush1.bf16.msra.mxu0 0
    %534 = vmatprep.subr.bf16.mxu0 0
    %535 = vmatpush1.bf16.msra.mxu0 0
    %536 = vmatprep.subr.bf16.mxu0 0
    %537 = vmatpush1.bf16.msra.mxu0 0
    %538 = vmatprep.subr.bf16.mxu0 0
    %539 = vmatpush1.bf16.msra.mxu0 %v523
    %540 = vmatprep.subr.bf16.mxu0 0
    %541 = vmatpush1.bf16.msra.mxu0 %v522
    %542 = vmatprep.subr.bf16.mxu0 0
    %543 = vmatpush2.bf16.msra.mxu0 0
    %544 = vmatprep.subr.bf16.mxu0 0
    %545 = vmatpush2.bf16.msra.mxu0 0
    %546 = vmatprep.subr.bf16.mxu0 0
    %547 = vmatpush2.bf16.msra.mxu0 0
    %548 = vmatprep.subr.bf16.mxu0 0
    %549 = vmatpush2.bf16.msra.mxu0 0
    %550 = vmatprep.subr.bf16.mxu0 0
    %551 = vmatpush2.bf16.msra.mxu0 0
    %552 = vmatprep.subr.bf16.mxu0 0
    %553 = vmatpush2.bf16.msra.mxu0 0
    %554 = vmatprep.subr.bf16.mxu0 0
    %555 = vmatpush2.bf16.msra.mxu0 0
    %556 = vmatprep.subr.bf16.mxu0 0
    %557 = vmatpush2.bf16.msra.mxu0 0
    %558 = vmatprep.mubr.bf16.mxu0 0
    %559 = vmatmul.mubr.bf16.gmra.mxu0 %v71
    %v560 = vpop.f32.mrf.mxu0
    %v561 = vadd.f32 %v512, %v560
    %v562 = vpop.f32.mrf.mxu0
    %v563 = vpop.f32.mrf.mxu0
    %v564 = vadd.f32 %v512, %v563
    %v565 = vpop.f32.mrf.mxu0
    %566 = vdwg.mxu0
    %v567 = vpack.c.bf16 %v564, %v561
    %v569 = vsel %vm249, %v433, 0
    %v572 = vsel %vm249, %v500, 0
    %574 = vmatprep.subr.bf16.mxu0 0
    %575 = vmatpush1.bf16.xpose.msra.mxu0 0
    %576 = vmatprep.subr.bf16.mxu0 0
    %577 = vmatpush1.bf16.xpose.msra.mxu0 0
    %578 = vmatprep.subr.bf16.mxu0 0
    %579 = vmatpush1.bf16.xpose.msra.mxu0 0
    %580 = vmatprep.subr.bf16.mxu0 0
    %581 = vmatpush1.bf16.xpose.msra.mxu0 0
    %582 = vmatprep.subr.bf16.mxu0 0
    %583 = vmatpush1.bf16.xpose.msra.mxu0 0
    %584 = vmatprep.subr.bf16.mxu0 0
    %585 = vmatpush1.bf16.xpose.msra.mxu0 0
    %586 = vmatprep.subr.bf16.mxu0 0
    %587 = vmatpush1.bf16.xpose.msra.mxu0 0
    %588 = vmatprep.subr.bf16.mxu0 0
    %589 = vmatpush1.bf16.xpose.msra.mxu0 %v572
    %590 = vmatprep.subr.bf16.mxu0 0
    %591 = vmatpush2.bf16.xpose.msra.mxu0 0
    %592 = vmatprep.subr.bf16.mxu0 0
    %593 = vmatpush2.bf16.xpose.msra.mxu0 0
    %594 = vmatprep.subr.bf16.mxu0 0
    %595 = vmatpush2.bf16.xpose.msra.mxu0 0
    %596 = vmatprep.subr.bf16.mxu0 0
    %597 = vmatpush2.bf16.xpose.msra.mxu0 0
    %598 = vmatprep.subr.bf16.mxu0 0
    %599 = vmatpush2.bf16.xpose.msra.mxu0 0
    %600 = vmatprep.subr.bf16.mxu0 0
    %601 = vmatpush2.bf16.xpose.msra.mxu0 0
    %602 = vmatprep.subr.bf16.mxu0 0
    %603 = vmatpush2.bf16.xpose.msra.mxu0 0
    %604 = vmatprep.subr.bf16.mxu0 0
    %605 = vmatpush2.bf16.xpose.msra.mxu0 0
    %606 = vmatprep.mubr.bf16.mxu0 0
    %607 = vmatmul.mubr.bf16.gmra.mxu0 %v569
    %v608 = vpop.f32.mrf.mxu0
    %v609 = vadd.f32 %v42, %v608
    %v610 = vpop.f32.mrf.mxu0
    %v611 = vpop.f32.mrf.mxu0
    %v612 = vadd.f32 %v43, %v611
    %v613 = vpop.f32.mrf.mxu0
    %614 = vdwg.mxu0
    %v615 = vsel %vm249, %v609, -inf
    %616 = vmax.xlane.f32.xlu0 %v615
    %v617 = vpop.xlane.xlu0 %616
    %v618 = vsel %vm249, %v612, -inf
    %619 = vmax.xlane.f32.xlu0 %v618
    %v620 = vpop.xlane.xlu0 %619
    %v621 = vsub.f32 %v609, %v617
    %v622 = vsub.f32 %v612, %v620
    %v623 = vmul.f32 %v621, 1.442695
    %v624 = vpow.pop %v623
    %v625 = vmul.f32 %v622, 1.442695
    %v626 = vpow.pop %v625
    %v627 = vsel %vm249, %v624, 0.0
    %628 = vadd.xlane.f32.xlu0 %v627
    %v629 = vpop.xlane.xlu0 %628
    %v630 = vsel %vm249, %v626, 0.0
    %631 = vadd.xlane.f32.xlu0 %v630
    %v632 = vpop.xlane.xlu0 %631
    %v633 = vrcp.pop %v629
    %v634 = vrcp.pop %v632
    %v635 = vmul.f32 %v624, %v633
    %v636 = vmul.f32 %v626, %v634
    %v637 = vpack.c.bf16 %v636, %v635
    %v639 = vsel %vm249, %v637, 0
    %641 = vmatprep.subr.bf16.mxu0 0
    %642 = vmatpush1.bf16.msra.mxu0 0
    %643 = vmatprep.subr.bf16.mxu0 0
    %644 = vmatpush1.bf16.msra.mxu0 0
    %645 = vmatprep.subr.bf16.mxu0 0
    %646 = vmatpush1.bf16.msra.mxu0 0
    %647 = vmatprep.subr.bf16.mxu0 0
    %648 = vmatpush1.bf16.msra.mxu0 0
    %649 = vmatprep.subr.bf16.mxu0 0
    %650 = vmatpush1.bf16.msra.mxu0 0
    %651 = vmatprep.subr.bf16.mxu0 0
    %652 = vmatpush1.bf16.msra.mxu0 0
    %653 = vmatprep.subr.bf16.mxu0 0
    %654 = vmatpush1.bf16.msra.mxu0 0
    %655 = vmatprep.subr.bf16.mxu0 0
    %656 = vmatpush1.bf16.msra.mxu0 %v567
    %657 = vmatprep.subr.bf16.mxu0 0
    %658 = vmatpush2.bf16.msra.mxu0 0
    %659 = vmatprep.subr.bf16.mxu0 0
    %660 = vmatpush2.bf16.msra.mxu0 0
    %661 = vmatprep.subr.bf16.mxu0 0
    %662 = vmatpush2.bf16.msra.mxu0 0
    %663 = vmatprep.subr.bf16.mxu0 0
    %664 = vmatpush2.bf16.msra.mxu0 0
    %665 = vmatprep.subr.bf16.mxu0 0
    %666 = vmatpush2.bf16.msra.mxu0 0
    %667 = vmatprep.subr.bf16.mxu0 0
    %668 = vmatpush2.bf16.msra.mxu0 0
    %669 = vmatprep.subr.bf16.mxu0 0
    %670 = vmatpush2.bf16.msra.mxu0 0
    %671 = vmatprep.subr.bf16.mxu0 0
    %672 = vmatpush2.bf16.msra.mxu0 0
    %673 = vmatprep.mubr.bf16.mxu0 0
    %674 = vmatmul.mubr.bf16.gmra.mxu0 %v639
    %v675 = vpop.f32.mrf.mxu0
    %v676 = vadd.f32 0.0, %v675
    %v677 = vpop.f32.mrf.mxu0
    %v678 = vpop.f32.mrf.mxu0
    %v679 = vadd.f32 0.0, %v678
    %v680 = vpop.f32.mrf.mxu0
    %681 = vdwg.mxu0
    %v682 = vpack.c.bf16 %v679, %v676
    %s683 = scalar_lea.vmem %s4, 8
    %v684 = vld [vmem:[%s683] sm:$0xf]
    %v685 = vld [vmem:[%s683 + $0x4] sm:$0xf]
    %v688 = vunpack.c.l.b16 %v684
    %v689 = vunpack.c.l.b16 %v685
    %v690 = vpack.c.b16 %v689, %v688
    %v693 = vsel %vm249, %v682, 0
    %695 = vmatprep.subr.bf16.mxu0 0
    %696 = vmatpush1.bf16.msra.mxu0 0
    %697 = vmatprep.subr.bf16.mxu0 0
    %698 = vmatpush1.bf16.msra.mxu0 0
    %699 = vmatprep.subr.bf16.mxu0 0
    %700 = vmatpush1.bf16.msra.mxu0 0
    %701 = vmatprep.subr.bf16.mxu0 0
    %702 = vmatpush1.bf16.msra.mxu0 0
    %703 = vmatprep.subr.bf16.mxu0 0
    %704 = vmatpush1.bf16.msra.mxu0 0
    %705 = vmatprep.subr.bf16.mxu0 0
    %706 = vmatpush1.bf16.msra.mxu0 0
    %707 = vmatprep.subr.bf16.mxu0 0
    %708 = vmatpush1.bf16.msra.mxu0 0
    %709 = vmatprep.subr.bf16.mxu0 0
    %710 = vmatpush1.bf16.msra.mxu0 %v690
    %711 = vmatprep.subr.bf16.mxu0 0
    %712 = vmatpush2.bf16.msra.mxu0 0
    %713 = vmatprep.subr.bf16.mxu0 0
    %714 = vmatpush2.bf16.msra.mxu0 0
    %715 = vmatprep.subr.bf16.mxu0 0
    %716 = vmatpush2.bf16.msra.mxu0 0
    %717 = vmatprep.subr.bf16.mxu0 0
    %718 = vmatpush2.bf16.msra.mxu0 0
    %719 = vmatprep.subr.bf16.mxu0 0
    %720 = vmatpush2.bf16.msra.mxu0 0
    %721 = vmatprep.subr.bf16.mxu0 0
    %722 = vmatpush2.bf16.msra.mxu0 0
    %723 = vmatprep.subr.bf16.mxu0 0
    %724 = vmatpush2.bf16.msra.mxu0 0
    %725 = vmatprep.subr.bf16.mxu0 0
    %726 = vmatpush2.bf16.msra.mxu0 0
    %727 = vmatprep.mubr.bf16.mxu0 0
    %728 = vmatmul.mubr.bf16.gmra.mxu0 %v693
    %v729 = vpop.f32.mrf.mxu0
    %v730 = vadd.f32 0.0, %v729
    %v731 = vpop.f32.mrf.mxu0
    %v732 = vpop.f32.mrf.mxu0
    %v733 = vadd.f32 0.0, %v732
    %v734 = vpop.f32.mrf.mxu0
    %735 = vdwg.mxu0
    %v738 = vunpack.c.l.b16 %v365
    %v739 = vunpack.c.l.b16 %v366
    %v740 = vpack.c.b16 %v739, %v738
    %v743 = vsel %vm249, %v364, 0
    %745 = vmatprep.subr.bf16.mxu0 0
    %746 = vmatpush1.bf16.msra.mxu0 0
    %747 = vmatprep.subr.bf16.mxu0 0
    %748 = vmatpush1.bf16.msra.mxu0 0
    %749 = vmatprep.subr.bf16.mxu0 0
    %750 = vmatpush1.bf16.msra.mxu0 0
    %751 = vmatprep.subr.bf16.mxu0 0
    %752 = vmatpush1.bf16.msra.mxu0 0
    %753 = vmatprep.subr.bf16.mxu0 0
    %754 = vmatpush1.bf16.msra.mxu0 0
    %755 = vmatprep.subr.bf16.mxu0 0
    %756 = vmatpush1.bf16.msra.mxu0 0
    %757 = vmatprep.subr.bf16.mxu0 0
    %758 = vmatpush1.bf16.msra.mxu0 0
    %759 = vmatprep.subr.bf16.mxu0 0
    %760 = vmatpush1.bf16.msra.mxu0 %v740
    %761 = vmatprep.subr.bf16.mxu0 0
    %762 = vmatpush2.bf16.msra.mxu0 0
    %763 = vmatprep.subr.bf16.mxu0 0
    %764 = vmatpush2.bf16.msra.mxu0 0
    %765 = vmatprep.subr.bf16.mxu0 0
    %766 = vmatpush2.bf16.msra.mxu0 0
    %767 = vmatprep.subr.bf16.mxu0 0
    %768 = vmatpush2.bf16.msra.mxu0 0
    %769 = vmatprep.subr.bf16.mxu0 0
    %770 = vmatpush2.bf16.msra.mxu0 0
    %771 = vmatprep.subr.bf16.mxu0 0
    %772 = vmatpush2.bf16.msra.mxu0 0
    %773 = vmatprep.subr.bf16.mxu0 0
    %774 = vmatpush2.bf16.msra.mxu0 0
    %775 = vmatprep.subr.bf16.mxu0 0
    %776 = vmatpush2.bf16.msra.mxu0 0
    %777 = vmatprep.mubr.bf16.mxu0 0
    %778 = vmatmul.mubr.bf16.gmra.mxu0 %v743
    %v779 = vpop.f32.mrf.mxu0
    %v780 = vadd.f32 %v730, %v779
    %v781 = vpop.f32.mrf.mxu0
    %v782 = vpop.f32.mrf.mxu0
    %v783 = vadd.f32 %v733, %v782
    %v784 = vpop.f32.mrf.mxu0
    %785 = vdwg.mxu0
    %v786 = vadd.f32 %v40, %v780
    %v787 = vadd.f32 %v41, %v783
    %v788 = vlaneseq
    %v789 = vshrl.u32 %v788, 7
    %v790 = vsub.s32 0, %v789
    %v791 = vrot.slane %v44, %v790
    %v792 = vadd.f32 %v786, %v791
    %v793 = vadd.f32 %v787, %v791
    %v794 = vsel %vm69, %v792, 0.0
    %795 = vadd.xlane.f32.xlu0 %v794
    %v796 = vpop.xlane.xlu0 %795
    %v797 = vsel %vm69, %v793, 0.0
    %798 = vadd.xlane.f32.xlu0 %v797
    %v799 = vpop.xlane.xlu0 %798
    %v800 = vrcp.pop 32.0
    %v801 = vmul.f32 %v796, %v800
    %v802 = vmul.f32 %v799, %v800
    %v803 = vsub.f32 %v792, %v801
    %v804 = vsub.f32 %v793, %v802
    %v805 = vmul.f32 %v803, %v803
    %v806 = vmul.f32 %v804, %v804
    %v807 = vsel %vm69, %v805, 0.0
    %808 = vadd.xlane.f32.xlu0 %v807
    %v809 = vpop.xlane.xlu0 %808
    %v810 = vsel %vm69, %v806, 0.0
    %811 = vadd.xlane.f32.xlu0 %v810
    %v812 = vpop.xlane.xlu0 %811
    %v813 = vmul.f32 %v809, %v800
    %v814 = vmul.f32 %v812, %v800
    %v815 = vadd.f32 %v813, 1e-05
    %v816 = vadd.f32 %v814, 1e-05
    %v817 = vrsqrt.pop %v815
    %v818 = vrsqrt.pop %v816
    %v819 = vmul.f32 %v803, %v817
    %v820 = vmul.f32 %v804, %v818
    %v821 = vlaneseq
    %v822 = vshrl.u32 %v821, 7
    %v823 = vsub.s32 1, %v822
    %v824 = vrot.slane %v44, %v823
    %v825 = vmul.f32 %v819, %v824
    %v826 = vmul.f32 %v820, %v824
    %v827 = vlaneseq
    %v828 = vshrl.u32 %v827, 7
    %v829 = vsub.s32 2, %v828
    %v830 = vrot.slane %v44, %v829
    %v831 = vadd.f32 %v825, %v830
    %v832 = vadd.f32 %v826, %v830
    %v833 = vpack.c.bf16 %v832, %v831
    %v834 = vld [vmem:[%s5] sm:$0xf]
    %v835 = vld [vmem:[%s5 + $0x4] sm:$0xf]
    %v836 = vld [vmem:[%s5 + $0x8] sm:$0xf]
    %v837 = vld [vmem:[%s5 + $0xc] sm:$0xf]
    %v838 = vld [vmem:[%s6] sm:$0x1]
    %v840 = vlaneseq
    %v841 = vshrl.u32 %v840, 7
    %v842 = vsub.s32 0, %v841
    %v843 = vrot.slane %v838, %v842
    %v849 = vunpack.c.l.b16 %v834
    %v850 = vunpack.c.l.b16 %v835
    %v851 = vunpack.c.l.b16 %v836
    %v852 = vunpack.c.l.b16 %v837
    %v853 = vpack.c.b16 %v850, %v849
    %v854 = vpack.c.b16 %v852, %v851
    %v858 = vsel %vm69, %v833, 0
    %860 = vmatprep.subr.bf16.mxu0 0
    %861 = vmatpush1.bf16.msra.mxu0 0
    %862 = vmatprep.subr.bf16.mxu0 0
    %863 = vmatpush1.bf16.msra.mxu0 0
    %864 = vmatprep.subr.bf16.mxu0 0
    %865 = vmatpush1.bf16.msra.mxu0 0
    %866 = vmatprep.subr.bf16.mxu0 0
    %867 = vmatpush1.bf16.msra.mxu0 0
    %868 = vmatprep.subr.bf16.mxu0 0
    %869 = vmatpush1.bf16.msra.mxu0 0
    %870 = vmatprep.subr.bf16.mxu0 0
    %871 = vmatpush1.bf16.msra.mxu0 0
    %872 = vmatprep.subr.bf16.mxu0 0
    %873 = vmatpush1.bf16.msra.mxu0 %v854
    %874 = vmatprep.subr.bf16.mxu0 0
    %875 = vmatpush1.bf16.msra.mxu0 %v853
    %876 = vmatprep.subr.bf16.mxu0 0
    %877 = vmatpush2.bf16.msra.mxu0 0
    %878 = vmatprep.subr.bf16.mxu0 0
    %879 = vmatpush2.bf16.msra.mxu0 0
    %880 = vmatprep.subr.bf16.mxu0 0
    %881 = vmatpush2.bf16.msra.mxu0 0
    %882 = vmatprep.subr.bf16.mxu0 0
    %883 = vmatpush2.bf16.msra.mxu0 0
    %884 = vmatprep.subr.bf16.mxu0 0
    %885 = vmatpush2.bf16.msra.mxu0 0
    %886 = vmatprep.subr.bf16.mxu0 0
    %887 = vmatpush2.bf16.msra.mxu0 0
    %888 = vmatprep.subr.bf16.mxu0 0
    %889 = vmatpush2.bf16.msra.mxu0 0
    %890 = vmatprep.subr.bf16.mxu0 0
    %891 = vmatpush2.bf16.msra.mxu0 0
    %892 = vmatprep.mubr.bf16.mxu0 0
    %893 = vmatmul.mubr.bf16.gmra.mxu0 %v858
    %v894 = vpop.f32.mrf.mxu0
    %v895 = vadd.f32 %v843, %v894
    %v896 = vpop.f32.mrf.mxu0
    %v897 = vpop.f32.mrf.mxu0
    %v898 = vadd.f32 %v843, %v897
    %v899 = vpop.f32.mrf.mxu0
    %900 = vdwg.mxu0
    %v901 = vmul.f32 %v895, 0.5
    %v902 = vmul.f32 %v898, 0.5
    %v903 = vmul.f32 %v895, 0.044715
    %v904 = vmul.f32 %v898, 0.044715
    %v905 = vmul.f32 %v903, %v895
    %v906 = vmul.f32 %v904, %v898
    %v907 = vmul.f32 %v905, %v895
    %v908 = vmul.f32 %v906, %v898
    %v909 = vadd.f32 %v895, %v907
    %v910 = vadd.f32 %v898, %v908
    %v911 = vmul.f32 %v909, 0.7978846
    %v912 = vmul.f32 %v910, 0.7978846
    %v913 = vtanh.pop %v911
    %v914 = vtanh.pop %v912
    %v915 = vadd.f32 %v913, 1.0
    %v916 = vadd.f32 %v914, 1.0
    %v917 = vmul.f32 %v901, %v915
    %v918 = vmul.f32 %v902, %v916
    %v919 = vpack.c.bf16 %v918, %v917
    %v920 = vld [vmem:[%s7] sm:$0xf]
    %v921 = vld [vmem:[%s7 + $0x4] sm:$0xf]
    %v922 = vld [vmem:[%s7 + $0x8] sm:$0xf]
    %v923 = vld [vmem:[%s7 + $0xc] sm:$0xf]
    %v924 = vld [vmem:[%s7 + $0x10] sm:$0xf]
    %v925 = vld [vmem:[%s7 + $0x14] sm:$0xf]
    %v926 = vld [vmem:[%s7 + $0x18] sm:$0xf]
    %v927 = vld [vmem:[%s7 + $0x1c] sm:$0xf]
    %v928 = vlaneseq
    %v929 = vshrl.u32 %v928, 7
    %v930 = vsub.s32 3, %v929
    %v931 = vrot.slane %v44, %v930
    %v940 = vunpack.c.l.b16 %v920
    %v941 = vunpack.c.l.b16 %v921
    %v942 = vunpack.c.l.b16 %v922
    %v943 = vunpack.c.l.b16 %v923
    %v944 = vunpack.c.l.b16 %v924
    %v945 = vunpack.c.l.b16 %v925
    %v946 = vunpack.c.l.b16 %v926
    %v947 = vunpack.c.l.b16 %v927
    %v948 = vpack.c.b16 %v941, %v940
    %v949 = vpack.c.b16 %v943, %v942
    %v950 = vpack.c.b16 %v945, %v944
    %v951 = vpack.c.b16 %v947, %v946
    %vm956 = vcmask 523264
    %v958 = vsel %vm956, %v919, 0
    %960 = vmatprep.subr.bf16.mxu0 0
    %961 = vmatpush1.bf16.msra.mxu0 0
    %962 = vmatprep.subr.bf16.mxu0 0
    %963 = vmatpush1.bf16.msra.mxu0 0
    %964 = vmatprep.subr.bf16.mxu0 0
    %965 = vmatpush1.bf16.msra.mxu0 0
    %966 = vmatprep.subr.bf16.mxu0 0
    %967 = vmatpush1.bf16.msra.mxu0 0
    %968 = vmatprep.subr.bf16.mxu0 0
    %969 = vmatpush1.bf16.msra.mxu0 %v951
    %970 = vmatprep.subr.bf16.mxu0 0
    %971 = vmatpush1.bf16.msra.mxu0 %v950
    %972 = vmatprep.subr.bf16.mxu0 0
    %973 = vmatpush1.bf16.msra.mxu0 %v949
    %974 = vmatprep.subr.bf16.mxu0 0
    %975 = vmatpush1.bf16.msra.mxu0 %v948
    %976 = vmatprep.subr.bf16.mxu0 0
    %977 = vmatpush2.bf16.msra.mxu0 0
    %978 = vmatprep.subr.bf16.mxu0 0
    %979 = vmatpush2.bf16.msra.mxu0 0
    %980 = vmatprep.subr.bf16.mxu0 0
    %981 = vmatpush2.bf16.msra.mxu0 0
    %982 = vmatprep.subr.bf16.mxu0 0
    %983 = vmatpush2.bf16.msra.mxu0 0
    %984 = vmatprep.subr.bf16.mxu0 0
    %985 = vmatpush2.bf16.msra.mxu0 0
    %986 = vmatprep.subr.bf16.mxu0 0
    %987 = vmatpush2.bf16.msra.mxu0 0
    %988 = vmatprep.subr.bf16.mxu0 0
    %989 = vmatpush2.bf16.msra.mxu0 0
    %990 = vmatprep.subr.bf16.mxu0 0
    %991 = vmatpush2.bf16.msra.mxu0 0
    %992 = vmatprep.mubr.bf16.mxu0 0
    %993 = vmatmul.mubr.bf16.gmra.mxu0 %v958
    %v994 = vpop.f32.mrf.mxu0
    %v995 = vadd.f32 %v931, %v994
    %v996 = vpop.f32.mrf.mxu0
    %v997 = vpop.f32.mrf.mxu0
    %v998 = vadd.f32 %v931, %v997
    %v999 = vpop.f32.mrf.mxu0
    %1000 = vdwg.mxu0
    %v1001 = vadd.f32 %v831, %v995
    %v1002 = vadd.f32 %v832, %v998
    %v1003 = vsel %vm69, %v1001, 0.0
    %1004 = vadd.xlane.f32.xlu0 %v1003
    %v1005 = vpop.xlane.xlu0 %1004
    %v1006 = vsel %vm69, %v1002, 0.0
    %1007 = vadd.xlane.f32.xlu0 %v1006
    %v1008 = vpop.xlane.xlu0 %1007
    %v1009 = vmul.f32 %v1005, %v800
    %v1010 = vmul.f32 %v1008, %v800
    %v1011 = vsub.f32 %v1001, %v1009
    %v1012 = vsub.f32 %v1002, %v1010
    %v1013 = vmul.f32 %v1011, %v1011
    %v1014 = vmul.f32 %v1012, %v1012
    %v1015 = vsel %vm69, %v1013, 0.0
    %1016 = vadd.xlane.f32.xlu0 %v1015
    %v1017 = vpop.xlane.xlu0 %1016
    %v1018 = vsel %vm69, %v1014, 0.0
    %1019 = vadd.xlane.f32.xlu0 %v1018
    %v1020 = vpop.xlane.xlu0 %1019
    %v1021 = vmul.f32 %v1017, %v800
    %v1022 = vmul.f32 %v1020, %v800
    %v1023 = vadd.f32 %v1021, 1e-05
    %v1024 = vadd.f32 %v1022, 1e-05
    %v1025 = vrsqrt.pop %v1023
    %v1026 = vrsqrt.pop %v1024
    %v1027 = vmul.f32 %v1011, %v1025
    %v1028 = vmul.f32 %v1012, %v1026
    %v1029 = vlaneseq
    %v1030 = vshrl.u32 %v1029, 7
    %v1031 = vsub.s32 4, %v1030
    %v1032 = vrot.slane %v44, %v1031
    %v1033 = vmul.f32 %v1027, %v1032
    %v1034 = vmul.f32 %v1028, %v1032
    %v1035 = vlaneseq
    %v1036 = vshrl.u32 %v1035, 7
    %v1037 = vsub.s32 5, %v1036
    %v1038 = vrot.slane %v44, %v1037
    %v1039 = vadd.f32 %v1033, %v1038
    %v1040 = vadd.f32 %v1034, %v1038
    %s1041 = scalar_lea.vmem %s8, 8
    %v1042 = vld [vmem:[%s1041] sm:$0x3f]
    %v1043 = vpack.c.bf16 %v1040, %v1039
    %s1044 = scalar_lea.vmem %s2, 96
    %v1045 = vld [vmem:[%s1044] sm:$0xf]
    %v1046 = vld [vmem:[%s1044 + $0x4] sm:$0xf]
    %v1047 = vld [vmem:[%s1044 + $0x8] sm:$0xf]
    %v1048 = vld [vmem:[%s1044 + $0xc] sm:$0xf]
    %s1049 = scalar_lea.vmem %s3, 6
    %v1050 = vld [vmem:[%s1049] sm:$0x1]
    %v1052 = vlaneseq
    %v1053 = vshrl.u32 %v1052, 7
    %v1054 = vsub.s32 0, %v1053
    %v1055 = vrot.slane %v1050, %v1054
    %v1061 = vunpack.c.l.b16 %v1045
    %v1062 = vunpack.c.l.b16 %v1046
    %v1063 = vunpack.c.l.b16 %v1047
    %v1064 = vunpack.c.l.b16 %v1048
    %v1065 = vpack.c.b16 %v1062, %v1061
    %v1066 = vpack.c.b16 %v1064, %v1063
    %v1070 = vsel %vm69, %v1043, 0
    %1072 = vmatprep.subr.bf16.mxu0 0
    %1073 = vmatpush1.bf16.msra.mxu0 0
    %1074 = vmatprep.subr.bf16.mxu0 0
    %1075 = vmatpush1.bf16.msra.mxu0 0
    %1076 = vmatprep.subr.bf16.mxu0 0
    %1077 = vmatpush1.bf16.msra.mxu0 0
    %1078 = vmatprep.subr.bf16.mxu0 0
    %1079 = vmatpush1.bf16.msra.mxu0 0
    %1080 = vmatprep.subr.bf16.mxu0 0
    %1081 = vmatpush1.bf16.msra.mxu0 0
    %1082 = vmatprep.subr.bf16.mxu0 0
    %1083 = vmatpush1.bf16.msra.mxu0 0
    %1084 = vmatprep.subr.bf16.mxu0 0
    %1085 = vmatpush1.bf16.msra.mxu0 %v1066
    %1086 = vmatprep.subr.bf16.mxu0 0
    %1087 = vmatpush1.bf16.msra.mxu0 %v1065
    %1088 = vmatprep.subr.bf16.mxu0 0
    %1089 = vmatpush2.bf16.msra.mxu0 0
    %1090 = vmatprep.subr.bf16.mxu0 0
    %1091 = vmatpush2.bf16.msra.mxu0 0
    %1092 = vmatprep.subr.bf16.mxu0 0
    %1093 = vmatpush2.bf16.msra.mxu0 0
    %1094 = vmatprep.subr.bf16.mxu0 0
    %1095 = vmatpush2.bf16.msra.mxu0 0
    %1096 = vmatprep.subr.bf16.mxu0 0
    %1097 = vmatpush2.bf16.msra.mxu0 0
    %1098 = vmatprep.subr.bf16.mxu0 0
    %1099 = vmatpush2.bf16.msra.mxu0 0
    %1100 = vmatprep.subr.bf16.mxu0 0
    %1101 = vmatpush2.bf16.msra.mxu0 0
    %1102 = vmatprep.subr.bf16.mxu0 0
    %1103 = vmatpush2.bf16.msra.mxu0 0
    %1104 = vmatprep.mubr.bf16.mxu0 0
    %1105 = vmatmul.mubr.bf16.gmra.mxu0 %v1070
    %v1106 = vpop.f32.mrf.mxu0
    %v1107 = vadd.f32 %v1055, %v1106
    %v1108 = vpop.f32.mrf.mxu0
    %v1109 = vpop.f32.mrf.mxu0
    %v1110 = vadd.f32 %v1055, %v1109
    %v1111 = vpop.f32.mrf.mxu0
    %1112 = vdwg.mxu0
    %v1113 = vpack.c.bf16 %v1110, %v1107
    %s1114 = scalar_lea.vmem %s2, 128
    %v1115 = vld [vmem:[%s1114] sm:$0xf]
    %v1116 = vld [vmem:[%s1114 + $0x4] sm:$0xf]
    %v1117 = vld [vmem:[%s1114 + $0x8] sm:$0xf]
    %v1118 = vld [vmem:[%s1114 + $0xc] sm:$0xf]
    %s1119 = scalar_lea.vmem %s3, 8
    %v1120 = vld [vmem:[%s1119] sm:$0x1]
    %v1122 = vlaneseq
    %v1123 = vshrl.u32 %v1122, 7
    %v1124 = vsub.s32 0, %v1123
    %v1125 = vrot.slane %v1120, %v1124
    %v1131 = vunpack.c.l.b16 %v1115
    %v1132 = vunpack.c.l.b16 %v1116
    %v1133 = vunpack.c.l.b16 %v1117
    %v1134 = vunpack.c.l.b16 %v1118
    %v1135 = vpack.c.b16 %v1132, %v1131
    %v1136 = vpack.c.b16 %v1134, %v1133
    %1139 = vmatprep.subr.bf16.mxu0 0
    %1140 = vmatpush1.bf16.msra.mxu0 0
    %1141 = vmatprep.subr.bf16.mxu0 0
    %1142 = vmatpush1.bf16.msra.mxu0 0
    %1143 = vmatprep.subr.bf16.mxu0 0
    %1144 = vmatpush1.bf16.msra.mxu0 0
    %1145 = vmatprep.subr.bf16.mxu0 0
    %1146 = vmatpush1.bf16.msra.mxu0 0
    %1147 = vmatprep.subr.bf16.mxu0 0
    %1148 = vmatpush1.bf16.msra.mxu0 0
    %1149 = vmatprep.subr.bf16.mxu0 0
    %1150 = vmatpush1.bf16.msra.mxu0 0
    %1151 = vmatprep.subr.bf16.mxu0 0
    %1152 = vmatpush1.bf16.msra.mxu0 %v1136
    %1153 = vmatprep.subr.bf16.mxu0 0
    %1154 = vmatpush1.bf16.msra.mxu0 %v1135
    %1155 = vmatprep.subr.bf16.mxu0 0
    %1156 = vmatpush2.bf16.msra.mxu0 0
    %1157 = vmatprep.subr.bf16.mxu0 0
    %1158 = vmatpush2.bf16.msra.mxu0 0
    %1159 = vmatprep.subr.bf16.mxu0 0
    %1160 = vmatpush2.bf16.msra.mxu0 0
    %1161 = vmatprep.subr.bf16.mxu0 0
    %1162 = vmatpush2.bf16.msra.mxu0 0
    %1163 = vmatprep.subr.bf16.mxu0 0
    %1164 = vmatpush2.bf16.msra.mxu0 0
    %1165 = vmatprep.subr.bf16.mxu0 0
    %1166 = vmatpush2.bf16.msra.mxu0 0
    %1167 = vmatprep.subr.bf16.mxu0 0
    %1168 = vmatpush2.bf16.msra.mxu0 0
    %1169 = vmatprep.subr.bf16.mxu0 0
    %1170 = vmatpush2.bf16.msra.mxu0 0
    %1171 = vmatprep.mubr.bf16.mxu0 0
    %1172 = vmatmul.mubr.bf16.gmra.mxu0 %v1070
    %v1173 = vpop.f32.mrf.mxu0
    %v1174 = vadd.f32 %v1125, %v1173
    %v1175 = vpop.f32.mrf.mxu0
    %v1176 = vpop.f32.mrf.mxu0
    %v1177 = vadd.f32 %v1125, %v1176
    %v1178 = vpop.f32.mrf.mxu0
    %1179 = vdwg.mxu0
    %v1180 = vpack.c.bf16 %v1177, %v1174
    %s1181 = scalar_lea.vmem %s2, 160
    %v1182 = vld [vmem:[%s1181] sm:$0xf]
    %v1183 = vld [vmem:[%s1181 + $0x4] sm:$0xf]
    %v1184 = vld [vmem:[%s1181 + $0x8] sm:$0xf]
    %v1185 = vld [vmem:[%s1181 + $0xc] sm:$0xf]
    %s1186 = scalar_lea.vmem %s3, 10
    %v1187 = vld [vmem:[%s1186] sm:$0x1]
    %v1189 = vlaneseq
    %v1190 = vshrl.u32 %v1189, 7
    %v1191 = vsub.s32 0, %v1190
    %v1192 = vrot.slane %v1187, %v1191
    %v1198 = vunpack.c.l.b16 %v1182
    %v1199 = vunpack.c.l.b16 %v1183
    %v1200 = vunpack.c.l.b16 %v1184
    %v1201 = vunpack.c.l.b16 %v1185
    %v1202 = vpack.c.b16 %v1199, %v1198
    %v1203 = vpack.c.b16 %v1201, %v1200
    %1206 = vmatprep.subr.bf16.mxu0 0
    %1207 = vmatpush1.bf16.msra.mxu0 0
    %1208 = vmatprep.subr.bf16.mxu0 0
    %1209 = vmatpush1.bf16.msra.mxu0 0
    %1210 = vmatprep.subr.bf16.mxu0 0
    %1211 = vmatpush1.bf16.msra.mxu0 0
    %1212 = vmatprep.subr.bf16.mxu0 0
    %1213 = vmatpush1.bf16.msra.mxu0 0
    %1214 = vmatprep.subr.bf16.mxu0 0
    %1215 = vmatpush1.bf16.msra.mxu0 0
    %1216 = vmatprep.subr.bf16.mxu0 0
    %1217 = vmatpush1.bf16.msra.mxu0 0
    %1218 = vmatprep.subr.bf16.mxu0 0
    %1219 = vmatpush1.bf16.msra.mxu0 %v1203
    %1220 = vmatprep.subr.bf16.mxu0 0
    %1221 = vmatpush1.bf16.msra.mxu0 %v1202
    %1222 = vmatprep.subr.bf16.mxu0 0
    %1223 = vmatpush2.bf16.msra.mxu0 0
    %1224 = vmatprep.subr.bf16.mxu0 0
    %1225 = vmatpush2.bf16.msra.mxu0 0
    %1226 = vmatprep.subr.bf16.mxu0 0
    %1227 = vmatpush2.bf16.msra.mxu0 0
    %1228 = vmatprep.subr.bf16.mxu0 0
    %1229 = vmatpush2.bf16.msra.mxu0 0
    %1230 = vmatprep.subr.bf16.mxu0 0
    %1231 = vmatpush2.bf16.msra.mxu0 0
    %1232 = vmatprep.subr.bf16.mxu0 0
    %1233 = vmatpush2.bf16.msra.mxu0 0
    %1234 = vmatprep.subr.bf16.mxu0 0
    %1235 = vmatpush2.bf16.msra.mxu0 0
    %1236 = vmatprep.subr.bf16.mxu0 0
    %1237 = vmatpush2.bf16.msra.mxu0 0
    %1238 = vmatprep.mubr.bf16.mxu0 0
    %1239 = vmatmul.mubr.bf16.gmra.mxu0 %v1070
    %v1240 = vpop.f32.mrf.mxu0
    %v1241 = vadd.f32 %v1192, %v1240
    %v1242 = vpop.f32.mrf.mxu0
    %v1243 = vpop.f32.mrf.mxu0
    %v1244 = vadd.f32 %v1192, %v1243
    %v1245 = vpop.f32.mrf.mxu0
    %1246 = vdwg.mxu0
    %v1247 = vpack.c.bf16 %v1244, %v1241
    %v1249 = vsel %vm249, %v1113, 0
    %v1252 = vsel %vm249, %v1180, 0
    %1254 = vmatprep.subr.bf16.mxu0 0
    %1255 = vmatpush1.bf16.xpose.msra.mxu0 0
    %1256 = vmatprep.subr.bf16.mxu0 0
    %1257 = vmatpush1.bf16.xpose.msra.mxu0 0
    %1258 = vmatprep.subr.bf16.mxu0 0
    %1259 = vmatpush1.bf16.xpose.msra.mxu0 0
    %1260 = vmatprep.subr.bf16.mxu0 0
    %1261 = vmatpush1.bf16.xpose.msra.mxu0 0
    %1262 = vmatprep.subr.bf16.mxu0 0
    %1263 = vmatpush1.bf16.xpose.msra.mxu0 0
    %1264 = vmatprep.subr.bf16.mxu0 0
    %1265 = vmatpush1.bf16.xpose.msra.mxu0 0
    %1266 = vmatprep.subr.bf16.mxu0 0
    %1267 = vmatpush1.bf16.xpose.msra.mxu0 0
    %1268 = vmatprep.subr.bf16.mxu0 0
    %1269 = vmatpush1.bf16.xpose.msra.mxu0 %v1252
    %1270 = vmatprep.subr.bf16.mxu0 0
    %1271 = vmatpush2.bf16.xpose.msra.mxu0 0
    %1272 = vmatprep.subr.bf16.mxu0 0
    %1273 = vmatpush2.bf16.xpose.msra.mxu0 0
    %1274 = vmatprep.subr.bf16.mxu0 0
    %1275 = vmatpush2.bf16.xpose.msra.mxu0 0
    %1276 = vmatprep.subr.bf16.mxu0 0
    %1277 = vmatpush2.bf16.xpose.msra.mxu0 0
    %1278 = vmatprep.subr.bf16.mxu0 0
    %1279 = vmatpush2.bf16.xpose.msra.mxu0 0
    %1280 = vmatprep.subr.bf16.mxu0 0
    %1281 = vmatpush2.bf16.xpose.msra.mxu0 0
    %1282 = vmatprep.subr.bf16.mxu0 0
    %1283 = vmatpush2.bf16.xpose.msra.mxu0 0
    %1284 = vmatprep.subr.bf16.mxu0 0
    %1285 = vmatpush2.bf16.xpose.msra.mxu0 0
    %1286 = vmatprep.mubr.bf16.mxu0 0
    %1287 = vmatmul.mubr.bf16.gmra.mxu0 %v1249
    %v1288 = vpop.f32.mrf.mxu0
    %v1289 = vadd.f32 %v42, %v1288
    %v1290 = vpop.f32.mrf.mxu0
    %v1291 = vpop.f32.mrf.mxu0
    %v1292 = vadd.f32 %v43, %v1291
    %v1293 = vpop.f32.mrf.mxu0
    %1294 = vdwg.mxu0
    %v1295 = vsel %vm249, %v1289, -inf
    %1296 = vmax.xlane.f32.xlu0 %v1295
    %v1297 = vpop.xlane.xlu0 %1296
    %v1298 = vsel %vm249, %v1292, -inf
    %1299 = vmax.xlane.f32.xlu0 %v1298
    %v1300 = vpop.xlane.xlu0 %1299
    %v1301 = vsub.f32 %v1289, %v1297
    %v1302 = vsub.f32 %v1292, %v1300
    %v1303 = vmul.f32 %v1301, 1.442695
    %v1304 = vpow.pop %v1303
    %v1305 = vmul.f32 %v1302, 1.442695
    %v1306 = vpow.pop %v1305
    %v1307 = vsel %vm249, %v1304, 0.0
    %1308 = vadd.xlane.f32.xlu0 %v1307
    %v1309 = vpop.xlane.xlu0 %1308
    %v1310 = vsel %vm249, %v1306, 0.0
    %1311 = vadd.xlane.f32.xlu0 %v1310
    %v1312 = vpop.xlane.xlu0 %1311
    %v1313 = vrcp.pop %v1309
    %v1314 = vrcp.pop %v1312
    %v1315 = vmul.f32 %v1304, %v1313
    %v1316 = vmul.f32 %v1306, %v1314
    %v1317 = vpack.c.bf16 %v1316, %v1315
    %v1319 = vsel %vm249, %v1317, 0
    %1321 = vmatprep.subr.bf16.mxu0 0
    %1322 = vmatpush1.bf16.msra.mxu0 0
    %1323 = vmatprep.subr.bf16.mxu0 0
    %1324 = vmatpush1.bf16.msra.mxu0 0
    %1325 = vmatprep.subr.bf16.mxu0 0
    %1326 = vmatpush1.bf16.msra.mxu0 0
    %1327 = vmatprep.subr.bf16.mxu0 0
    %1328 = vmatpush1.bf16.msra.mxu0 0
    %1329 = vmatprep.subr.bf16.mxu0 0
    %1330 = vmatpush1.bf16.msra.mxu0 0
    %1331 = vmatprep.subr.bf16.mxu0 0
    %1332 = vmatpush1.bf16.msra.mxu0 0
    %1333 = vmatprep.subr.bf16.mxu0 0
    %1334 = vmatpush1.bf16.msra.mxu0 0
    %1335 = vmatprep.subr.bf16.mxu0 0
    %1336 = vmatpush1.bf16.msra.mxu0 %v1247
    %1337 = vmatprep.subr.bf16.mxu0 0
    %1338 = vmatpush2.bf16.msra.mxu0 0
    %1339 = vmatprep.subr.bf16.mxu0 0
    %1340 = vmatpush2.bf16.msra.mxu0 0
    %1341 = vmatprep.subr.bf16.mxu0 0
    %1342 = vmatpush2.bf16.msra.mxu0 0
    %1343 = vmatprep.subr.bf16.mxu0 0
    %1344 = vmatpush2.bf16.msra.mxu0 0
    %1345 = vmatprep.subr.bf16.mxu0 0
    %1346 = vmatpush2.bf16.msra.mxu0 0
    %1347 = vmatprep.subr.bf16.mxu0 0
    %1348 = vmatpush2.bf16.msra.mxu0 0
    %1349 = vmatprep.subr.bf16.mxu0 0
    %1350 = vmatpush2.bf16.msra.mxu0 0
    %1351 = vmatprep.subr.bf16.mxu0 0
    %1352 = vmatpush2.bf16.msra.mxu0 0
    %1353 = vmatprep.mubr.bf16.mxu0 0
    %1354 = vmatmul.mubr.bf16.gmra.mxu0 %v1319
    %v1355 = vpop.f32.mrf.mxu0
    %v1356 = vadd.f32 0.0, %v1355
    %v1357 = vpop.f32.mrf.mxu0
    %v1358 = vpop.f32.mrf.mxu0
    %v1359 = vadd.f32 0.0, %v1358
    %v1360 = vpop.f32.mrf.mxu0
    %1361 = vdwg.mxu0
    %v1362 = vpack.c.bf16 %v1359, %v1356
    %s1363 = scalar_lea.vmem %s4, 16
    %v1364 = vld [vmem:[%s1363] sm:$0xf]
    %v1365 = vld [vmem:[%s1363 + $0x4] sm:$0xf]
    %s1366 = scalar_lea.vmem %s2, 112
    %v1367 = vld [vmem:[%s1366] sm:$0xf]
    %v1368 = vld [vmem:[%s1366 + $0x4] sm:$0xf]
    %v1369 = vld [vmem:[%s1366 + $0x8] sm:$0xf]
    %v1370 = vld [vmem:[%s1366 + $0xc] sm:$0xf]
    %s1371 = scalar_lea.vmem %s3, 7
    %v1372 = vld [vmem:[%s1371] sm:$0x1]
    %v1374 = vlaneseq
    %v1375 = vshrl.u32 %v1374, 7
    %v1376 = vsub.s32 0, %v1375
    %v1377 = vrot.slane %v1372, %v1376
    %v1383 = vunpack.c.l.b16 %v1367
    %v1384 = vunpack.c.l.b16 %v1368
    %v1385 = vunpack.c.l.b16 %v1369
    %v1386 = vunpack.c.l.b16 %v1370
    %v1387 = vpack.c.b16 %v1384, %v1383
    %v1388 = vpack.c.b16 %v1386, %v1385
    %1391 = vmatprep.subr.bf16.mxu0 0
    %1392 = vmatpush1.bf16.msra.mxu0 0
    %1393 = vmatprep.subr.bf16.mxu0 0
    %1394 = vmatpush1.bf16.msra.mxu0 0
    %1395 = vmatprep.subr.bf16.mxu0 0
    %1396 = vmatpush1.bf16.msra.mxu0 0
    %1397 = vmatprep.subr.bf16.mxu0 0
    %1398 = vmatpush1.bf16.msra.mxu0 0
    %1399 = vmatprep.subr.bf16.mxu0 0
    %1400 = vmatpush1.bf16.msra.mxu0 0
    %1401 = vmatprep.subr.bf16.mxu0 0
    %1402 = vmatpush1.bf16.msra.mxu0 0
    %1403 = vmatprep.subr.bf16.mxu0 0
    %1404 = vmatpush1.bf16.msra.mxu0 %v1388
    %1405 = vmatprep.subr.bf16.mxu0 0
    %1406 = vmatpush1.bf16.msra.mxu0 %v1387
    %1407 = vmatprep.subr.bf16.mxu0 0
    %1408 = vmatpush2.bf16.msra.mxu0 0
    %1409 = vmatprep.subr.bf16.mxu0 0
    %1410 = vmatpush2.bf16.msra.mxu0 0
    %1411 = vmatprep.subr.bf16.mxu0 0
    %1412 = vmatpush2.bf16.msra.mxu0 0
    %1413 = vmatprep.subr.bf16.mxu0 0
    %1414 = vmatpush2.bf16.msra.mxu0 0
    %1415 = vmatprep.subr.bf16.mxu0 0
    %1416 = vmatpush2.bf16.msra.mxu0 0
    %1417 = vmatprep.subr.bf16.mxu0 0
    %1418 = vmatpush2.bf16.msra.mxu0 0
    %1419 = vmatprep.subr.bf16.mxu0 0
    %1420 = vmatpush2.bf16.msra.mxu0 0
    %1421 = vmatprep.subr.bf16.mxu0 0
    %1422 = vmatpush2.bf16.msra.mxu0 0
    %1423 = vmatprep.mubr.bf16.mxu0 0
    %1424 = vmatmul.mubr.bf16.gmra.mxu0 %v1070
    %v1425 = vpop.f32.mrf.mxu0
    %v1426 = vadd.f32 %v1377, %v1425
    %v1427 = vpop.f32.mrf.mxu0
    %v1428 = vpop.f32.mrf.mxu0
    %v1429 = vadd.f32 %v1377, %v1428
    %v1430 = vpop.f32.mrf.mxu0
    %1431 = vdwg.mxu0
    %v1432 = vpack.c.bf16 %v1429, %v1426
    %s1433 = scalar_lea.vmem %s2, 144
    %v1434 = vld [vmem:[%s1433] sm:$0xf]
    %v1435 = vld [vmem:[%s1433 + $0x4] sm:$0xf]
    %v1436 = vld [vmem:[%s1433 + $0x8] sm:$0xf]
    %v1437 = vld [vmem:[%s1433 + $0xc] sm:$0xf]
    %s1438 = scalar_lea.vmem %s3, 9
    %v1439 = vld [vmem:[%s1438] sm:$0x1]
    %v1441 = vlaneseq
    %v1442 = vshrl.u32 %v1441, 7
    %v1443 = vsub.s32 0, %v1442
    %v1444 = vrot.slane %v1439, %v1443
    %v1450 = vunpack.c.l.b16 %v1434
    %v1451 = vunpack.c.l.b16 %v1435
    %v1452 = vunpack.c.l.b16 %v1436
    %v1453 = vunpack.c.l.b16 %v1437
    %v1454 = vpack.c.b16 %v1451, %v1450
    %v1455 = vpack.c.b16 %v1453, %v1452
    %1458 = vmatprep.subr.bf16.mxu0 0
    %1459 = vmatpush1.bf16.msra.mxu0 0
    %1460 = vmatprep.subr.bf16.mxu0 0
    %1461 = vmatpush1.bf16.msra.mxu0 0
    %1462 = vmatprep.subr.bf16.mxu0 0
    %1463 = vmatpush1.bf16.msra.mxu0 0
    %1464 = vmatprep.subr.bf16.mxu0 0
    %1465 = vmatpush1.bf16.msra.mxu0 0
    %1466 = vmatprep.subr.bf16.mxu0 0
    %1467 = vmatpush1.bf16.msra.mxu0 0
    %1468 = vmatprep.subr.bf16.mxu0 0
    %1469 = vmatpush1.bf16.msra.mxu0 0
    %1470 = vmatprep.subr.bf16.mxu0 0
    %1471 = vmatpush1.bf16.msra.mxu0 %v1455
    %1472 = vmatprep.subr.bf16.mxu0 0
    %1473 = vmatpush1.bf16.msra.mxu0 %v1454
    %1474 = vmatprep.subr.bf16.mxu0 0
    %1475 = vmatpush2.bf16.msra.mxu0 0
    %1476 = vmatprep.subr.bf16.mxu0 0
    %1477 = vmatpush2.bf16.msra.mxu0 0
    %1478 = vmatprep.subr.bf16.mxu0 0
    %1479 = vmatpush2.bf16.msra.mxu0 0
    %1480 = vmatprep.subr.bf16.mxu0 0
    %1481 = vmatpush2.bf16.msra.mxu0 0
    %1482 = vmatprep.subr.bf16.mxu0 0
    %1483 = vmatpush2.bf16.msra.mxu0 0
    %1484 = vmatprep.subr.bf16.mxu0 0
    %1485 = vmatpush2.bf16.msra.mxu0 0
    %1486 = vmatprep.subr.bf16.mxu0 0
    %1487 = vmatpush2.bf16.msra.mxu0 0
    %1488 = vmatprep.subr.bf16.mxu0 0
    %1489 = vmatpush2.bf16.msra.mxu0 0
    %1490 = vmatprep.mubr.bf16.mxu0 0
    %1491 = vmatmul.mubr.bf16.gmra.mxu0 %v1070
    %v1492 = vpop.f32.mrf.mxu0
    %v1493 = vadd.f32 %v1444, %v1492
    %v1494 = vpop.f32.mrf.mxu0
    %v1495 = vpop.f32.mrf.mxu0
    %v1496 = vadd.f32 %v1444, %v1495
    %v1497 = vpop.f32.mrf.mxu0
    %1498 = vdwg.mxu0
    %v1499 = vpack.c.bf16 %v1496, %v1493
    %s1500 = scalar_lea.vmem %s2, 176
    %v1501 = vld [vmem:[%s1500] sm:$0xf]
    %v1502 = vld [vmem:[%s1500 + $0x4] sm:$0xf]
    %v1503 = vld [vmem:[%s1500 + $0x8] sm:$0xf]
    %v1504 = vld [vmem:[%s1500 + $0xc] sm:$0xf]
    %s1505 = scalar_lea.vmem %s3, 11
    %v1506 = vld [vmem:[%s1505] sm:$0x1]
    %v1508 = vlaneseq
    %v1509 = vshrl.u32 %v1508, 7
    %v1510 = vsub.s32 0, %v1509
    %v1511 = vrot.slane %v1506, %v1510
    %v1517 = vunpack.c.l.b16 %v1501
    %v1518 = vunpack.c.l.b16 %v1502
    %v1519 = vunpack.c.l.b16 %v1503
    %v1520 = vunpack.c.l.b16 %v1504
    %v1521 = vpack.c.b16 %v1518, %v1517
    %v1522 = vpack.c.b16 %v1520, %v1519
    %1525 = vmatprep.subr.bf16.mxu0 0
    %1526 = vmatpush1.bf16.msra.mxu0 0
    %1527 = vmatprep.subr.bf16.mxu0 0
    %1528 = vmatpush1.bf16.msra.mxu0 0
    %1529 = vmatprep.subr.bf16.mxu0 0
    %1530 = vmatpush1.bf16.msra.mxu0 0
    %1531 = vmatprep.subr.bf16.mxu0 0
    %1532 = vmatpush1.bf16.msra.mxu0 0
    %1533 = vmatprep.subr.bf16.mxu0 0
    %1534 = vmatpush1.bf16.msra.mxu0 0
    %1535 = vmatprep.subr.bf16.mxu0 0
    %1536 = vmatpush1.bf16.msra.mxu0 0
    %1537 = vmatprep.subr.bf16.mxu0 0
    %1538 = vmatpush1.bf16.msra.mxu0 %v1522
    %1539 = vmatprep.subr.bf16.mxu0 0
    %1540 = vmatpush1.bf16.msra.mxu0 %v1521
    %1541 = vmatprep.subr.bf16.mxu0 0
    %1542 = vmatpush2.bf16.msra.mxu0 0
    %1543 = vmatprep.subr.bf16.mxu0 0
    %1544 = vmatpush2.bf16.msra.mxu0 0
    %1545 = vmatprep.subr.bf16.mxu0 0
    %1546 = vmatpush2.bf16.msra.mxu0 0
    %1547 = vmatprep.subr.bf16.mxu0 0
    %1548 = vmatpush2.bf16.msra.mxu0 0
    %1549 = vmatprep.subr.bf16.mxu0 0
    %1550 = vmatpush2.bf16.msra.mxu0 0
    %1551 = vmatprep.subr.bf16.mxu0 0
    %1552 = vmatpush2.bf16.msra.mxu0 0
    %1553 = vmatprep.subr.bf16.mxu0 0
    %1554 = vmatpush2.bf16.msra.mxu0 0
    %1555 = vmatprep.subr.bf16.mxu0 0
    %1556 = vmatpush2.bf16.msra.mxu0 0
    %1557 = vmatprep.mubr.bf16.mxu0 0
    %1558 = vmatmul.mubr.bf16.gmra.mxu0 %v1070
    %v1559 = vpop.f32.mrf.mxu0
    %v1560 = vadd.f32 %v1511, %v1559
    %v1561 = vpop.f32.mrf.mxu0
    %v1562 = vpop.f32.mrf.mxu0
    %v1563 = vadd.f32 %v1511, %v1562
    %v1564 = vpop.f32.mrf.mxu0
    %1565 = vdwg.mxu0
    %v1566 = vpack.c.bf16 %v1563, %v1560
    %v1568 = vsel %vm249, %v1432, 0
    %v1571 = vsel %vm249, %v1499, 0
    %1573 = vmatprep.subr.bf16.mxu0 0
    %1574 = vmatpush1.bf16.xpose.msra.mxu0 0
    %1575 = vmatprep.subr.bf16.mxu0 0
    %1576 = vmatpush1.bf16.xpose.msra.mxu0 0
    %1577 = vmatprep.subr.bf16.mxu0 0
    %1578 = vmatpush1.bf16.xpose.msra.mxu0 0
    %1579 = vmatprep.subr.bf16.mxu0 0
    %1580 = vmatpush1.bf16.xpose.msra.mxu0 0
    %1581 = vmatprep.subr.bf16.mxu0 0
    %1582 = vmatpush1.bf16.xpose.msra.mxu0 0
    %1583 = vmatprep.subr.bf16.mxu0 0
    %1584 = vmatpush1.bf16.xpose.msra.mxu0 0
    %1585 = vmatprep.subr.bf16.mxu0 0
    %1586 = vmatpush1.bf16.xpose.msra.mxu0 0
    %1587 = vmatprep.subr.bf16.mxu0 0
    %1588 = vmatpush1.bf16.xpose.msra.mxu0 %v1571
    %1589 = vmatprep.subr.bf16.mxu0 0
    %1590 = vmatpush2.bf16.xpose.msra.mxu0 0
    %1591 = vmatprep.subr.bf16.mxu0 0
    %1592 = vmatpush2.bf16.xpose.msra.mxu0 0
    %1593 = vmatprep.subr.bf16.mxu0 0
    %1594 = vmatpush2.bf16.xpose.msra.mxu0 0
    %1595 = vmatprep.subr.bf16.mxu0 0
    %1596 = vmatpush2.bf16.xpose.msra.mxu0 0
    %1597 = vmatprep.subr.bf16.mxu0 0
    %1598 = vmatpush2.bf16.xpose.msra.mxu0 0
    %1599 = vmatprep.subr.bf16.mxu0 0
    %1600 = vmatpush2.bf16.xpose.msra.mxu0 0
    %1601 = vmatprep.subr.bf16.mxu0 0
    %1602 = vmatpush2.bf16.xpose.msra.mxu0 0
    %1603 = vmatprep.subr.bf16.mxu0 0
    %1604 = vmatpush2.bf16.xpose.msra.mxu0 0
    %1605 = vmatprep.mubr.bf16.mxu0 0
    %1606 = vmatmul.mubr.bf16.gmra.mxu0 %v1568
    %v1607 = vpop.f32.mrf.mxu0
    %v1608 = vadd.f32 %v42, %v1607
    %v1609 = vpop.f32.mrf.mxu0
    %v1610 = vpop.f32.mrf.mxu0
    %v1611 = vadd.f32 %v43, %v1610
    %v1612 = vpop.f32.mrf.mxu0
    %1613 = vdwg.mxu0
    %v1614 = vsel %vm249, %v1608, -inf
    %1615 = vmax.xlane.f32.xlu0 %v1614
    %v1616 = vpop.xlane.xlu0 %1615
    %v1617 = vsel %vm249, %v1611, -inf
    %1618 = vmax.xlane.f32.xlu0 %v1617
    %v1619 = vpop.xlane.xlu0 %1618
    %v1620 = vsub.f32 %v1608, %v1616
    %v1621 = vsub.f32 %v1611, %v1619
    %v1622 = vmul.f32 %v1620, 1.442695
    %v1623 = vpow.pop %v1622
    %v1624 = vmul.f32 %v1621, 1.442695
    %v1625 = vpow.pop %v1624
    %v1626 = vsel %vm249, %v1623, 0.0
    %1627 = vadd.xlane.f32.xlu0 %v1626
    %v1628 = vpop.xlane.xlu0 %1627
    %v1629 = vsel %vm249, %v1625, 0.0
    %1630 = vadd.xlane.f32.xlu0 %v1629
    %v1631 = vpop.xlane.xlu0 %1630
    %v1632 = vrcp.pop %v1628
    %v1633 = vrcp.pop %v1631
    %v1634 = vmul.f32 %v1623, %v1632
    %v1635 = vmul.f32 %v1625, %v1633
    %v1636 = vpack.c.bf16 %v1635, %v1634
    %v1638 = vsel %vm249, %v1636, 0
    %1640 = vmatprep.subr.bf16.mxu0 0
    %1641 = vmatpush1.bf16.msra.mxu0 0
    %1642 = vmatprep.subr.bf16.mxu0 0
    %1643 = vmatpush1.bf16.msra.mxu0 0
    %1644 = vmatprep.subr.bf16.mxu0 0
    %1645 = vmatpush1.bf16.msra.mxu0 0
    %1646 = vmatprep.subr.bf16.mxu0 0
    %1647 = vmatpush1.bf16.msra.mxu0 0
    %1648 = vmatprep.subr.bf16.mxu0 0
    %1649 = vmatpush1.bf16.msra.mxu0 0
    %1650 = vmatprep.subr.bf16.mxu0 0
    %1651 = vmatpush1.bf16.msra.mxu0 0
    %1652 = vmatprep.subr.bf16.mxu0 0
    %1653 = vmatpush1.bf16.msra.mxu0 0
    %1654 = vmatprep.subr.bf16.mxu0 0
    %1655 = vmatpush1.bf16.msra.mxu0 %v1566
    %1656 = vmatprep.subr.bf16.mxu0 0
    %1657 = vmatpush2.bf16.msra.mxu0 0
    %1658 = vmatprep.subr.bf16.mxu0 0
    %1659 = vmatpush2.bf16.msra.mxu0 0
    %1660 = vmatprep.subr.bf16.mxu0 0
    %1661 = vmatpush2.bf16.msra.mxu0 0
    %1662 = vmatprep.subr.bf16.mxu0 0
    %1663 = vmatpush2.bf16.msra.mxu0 0
    %1664 = vmatprep.subr.bf16.mxu0 0
    %1665 = vmatpush2.bf16.msra.mxu0 0
    %1666 = vmatprep.subr.bf16.mxu0 0
    %1667 = vmatpush2.bf16.msra.mxu0 0
    %1668 = vmatprep.subr.bf16.mxu0 0
    %1669 = vmatpush2.bf16.msra.mxu0 0
    %1670 = vmatprep.subr.bf16.mxu0 0
    %1671 = vmatpush2.bf16.msra.mxu0 0
    %1672 = vmatprep.mubr.bf16.mxu0 0
    %1673 = vmatmul.mubr.bf16.gmra.mxu0 %v1638
    %v1674 = vpop.f32.mrf.mxu0
    %v1675 = vadd.f32 0.0, %v1674
    %v1676 = vpop.f32.mrf.mxu0
    %v1677 = vpop.f32.mrf.mxu0
    %v1678 = vadd.f32 0.0, %v1677
    %v1679 = vpop.f32.mrf.mxu0
    %1680 = vdwg.mxu0
    %v1681 = vpack.c.bf16 %v1678, %v1675
    %s1682 = scalar_lea.vmem %s4, 24
    %v1683 = vld [vmem:[%s1682] sm:$0xf]
    %v1684 = vld [vmem:[%s1682 + $0x4] sm:$0xf]
    %v1687 = vunpack.c.l.b16 %v1683
    %v1688 = vunpack.c.l.b16 %v1684
    %v1689 = vpack.c.b16 %v1688, %v1687
    %v1692 = vsel %vm249, %v1681, 0
    %1694 = vmatprep.subr.bf16.mxu0 0
    %1695 = vmatpush1.bf16.msra.mxu0 0
    %1696 = vmatprep.subr.bf16.mxu0 0
    %1697 = vmatpush1.bf16.msra.mxu0 0
    %1698 = vmatprep.subr.bf16.mxu0 0
    %1699 = vmatpush1.bf16.msra.mxu0 0
    %1700 = vmatprep.subr.bf16.mxu0 0
    %1701 = vmatpush1.bf16.msra.mxu0 0
    %1702 = vmatprep.subr.bf16.mxu0 0
    %1703 = vmatpush1.bf16.msra.mxu0 0
    %1704 = vmatprep.subr.bf16.mxu0 0
    %1705 = vmatpush1.bf16.msra.mxu0 0
    %1706 = vmatprep.subr.bf16.mxu0 0
    %1707 = vmatpush1.bf16.msra.mxu0 0
    %1708 = vmatprep.subr.bf16.mxu0 0
    %1709 = vmatpush1.bf16.msra.mxu0 %v1689
    %1710 = vmatprep.subr.bf16.mxu0 0
    %1711 = vmatpush2.bf16.msra.mxu0 0
    %1712 = vmatprep.subr.bf16.mxu0 0
    %1713 = vmatpush2.bf16.msra.mxu0 0
    %1714 = vmatprep.subr.bf16.mxu0 0
    %1715 = vmatpush2.bf16.msra.mxu0 0
    %1716 = vmatprep.subr.bf16.mxu0 0
    %1717 = vmatpush2.bf16.msra.mxu0 0
    %1718 = vmatprep.subr.bf16.mxu0 0
    %1719 = vmatpush2.bf16.msra.mxu0 0
    %1720 = vmatprep.subr.bf16.mxu0 0
    %1721 = vmatpush2.bf16.msra.mxu0 0
    %1722 = vmatprep.subr.bf16.mxu0 0
    %1723 = vmatpush2.bf16.msra.mxu0 0
    %1724 = vmatprep.subr.bf16.mxu0 0
    %1725 = vmatpush2.bf16.msra.mxu0 0
    %1726 = vmatprep.mubr.bf16.mxu0 0
    %1727 = vmatmul.mubr.bf16.gmra.mxu0 %v1692
    %v1728 = vpop.f32.mrf.mxu0
    %v1729 = vadd.f32 0.0, %v1728
    %v1730 = vpop.f32.mrf.mxu0
    %v1731 = vpop.f32.mrf.mxu0
    %v1732 = vadd.f32 0.0, %v1731
    %v1733 = vpop.f32.mrf.mxu0
    %1734 = vdwg.mxu0
    %v1737 = vunpack.c.l.b16 %v1364
    %v1738 = vunpack.c.l.b16 %v1365
    %v1739 = vpack.c.b16 %v1738, %v1737
    %v1742 = vsel %vm249, %v1362, 0
    %1744 = vmatprep.subr.bf16.mxu0 0
    %1745 = vmatpush1.bf16.msra.mxu0 0
    %1746 = vmatprep.subr.bf16.mxu0 0
    %1747 = vmatpush1.bf16.msra.mxu0 0
    %1748 = vmatprep.subr.bf16.mxu0 0
    %1749 = vmatpush1.bf16.msra.mxu0 0
    %1750 = vmatprep.subr.bf16.mxu0 0
    %1751 = vmatpush1.bf16.msra.mxu0 0
    %1752 = vmatprep.subr.bf16.mxu0 0
    %1753 = vmatpush1.bf16.msra.mxu0 0
    %1754 = vmatprep.subr.bf16.mxu0 0
    %1755 = vmatpush1.bf16.msra.mxu0 0
    %1756 = vmatprep.subr.bf16.mxu0 0
    %1757 = vmatpush1.bf16.msra.mxu0 0
    %1758 = vmatprep.subr.bf16.mxu0 0
    %1759 = vmatpush1.bf16.msra.mxu0 %v1739
    %1760 = vmatprep.subr.bf16.mxu0 0
    %1761 = vmatpush2.bf16.msra.mxu0 0
    %1762 = vmatprep.subr.bf16.mxu0 0
    %1763 = vmatpush2.bf16.msra.mxu0 0
    %1764 = vmatprep.subr.bf16.mxu0 0
    %1765 = vmatpush2.bf16.msra.mxu0 0
    %1766 = vmatprep.subr.bf16.mxu0 0
    %1767 = vmatpush2.bf16.msra.mxu0 0
    %1768 = vmatprep.subr.bf16.mxu0 0
    %1769 = vmatpush2.bf16.msra.mxu0 0
    %1770 = vmatprep.subr.bf16.mxu0 0
    %1771 = vmatpush2.bf16.msra.mxu0 0
    %1772 = vmatprep.subr.bf16.mxu0 0
    %1773 = vmatpush2.bf16.msra.mxu0 0
    %1774 = vmatprep.subr.bf16.mxu0 0
    %1775 = vmatpush2.bf16.msra.mxu0 0
    %1776 = vmatprep.mubr.bf16.mxu0 0
    %1777 = vmatmul.mubr.bf16.gmra.mxu0 %v1742
    %v1778 = vpop.f32.mrf.mxu0
    %v1779 = vadd.f32 %v1729, %v1778
    %v1780 = vpop.f32.mrf.mxu0
    %v1781 = vpop.f32.mrf.mxu0
    %v1782 = vadd.f32 %v1732, %v1781
    %v1783 = vpop.f32.mrf.mxu0
    %1784 = vdwg.mxu0
    %v1785 = vadd.f32 %v1039, %v1779
    %v1786 = vadd.f32 %v1040, %v1782
    %v1787 = vlaneseq
    %v1788 = vshrl.u32 %v1787, 7
    %v1789 = vsub.s32 0, %v1788
    %v1790 = vrot.slane %v1042, %v1789
    %v1791 = vadd.f32 %v1785, %v1790
    %v1792 = vadd.f32 %v1786, %v1790
    %v1793 = vsel %vm69, %v1791, 0.0
    %1794 = vadd.xlane.f32.xlu0 %v1793
    %v1795 = vpop.xlane.xlu0 %1794
    %v1796 = vsel %vm69, %v1792, 0.0
    %1797 = vadd.xlane.f32.xlu0 %v1796
    %v1798 = vpop.xlane.xlu0 %1797
    %v1799 = vmul.f32 %v1795, %v800
    %v1800 = vmul.f32 %v1798, %v800
    %v1801 = vsub.f32 %v1791, %v1799
    %v1802 = vsub.f32 %v1792, %v1800
    %v1803 = vmul.f32 %v1801, %v1801
    %v1804 = vmul.f32 %v1802, %v1802
    %v1805 = vsel %vm69, %v1803, 0.0
    %1806 = vadd.xlane.f32.xlu0 %v1805
    %v1807 = vpop.xlane.xlu0 %1806
    %v1808 = vsel %vm69, %v1804, 0.0
    %1809 = vadd.xlane.f32.xlu0 %v1808
    %v1810 = vpop.xlane.xlu0 %1809
    %v1811 = vmul.f32 %v1807, %v800
    %v1812 = vmul.f32 %v1810, %v800
    %v1813 = vadd.f32 %v1811, 1e-05
    %v1814 = vadd.f32 %v1812, 1e-05
    %v1815 = vrsqrt.pop %v1813
    %v1816 = vrsqrt.pop %v1814
    %v1817 = vmul.f32 %v1801, %v1815
    %v1818 = vmul.f32 %v1802, %v1816
    %v1819 = vlaneseq
    %v1820 = vshrl.u32 %v1819, 7
    %v1821 = vsub.s32 1, %v1820
    %v1822 = vrot.slane %v1042, %v1821
    %v1823 = vmul.f32 %v1817, %v1822
    %v1824 = vmul.f32 %v1818, %v1822
    %v1825 = vlaneseq
    %v1826 = vshrl.u32 %v1825, 7
    %v1827 = vsub.s32 2, %v1826
    %v1828 = vrot.slane %v1042, %v1827
    %v1829 = vadd.f32 %v1823, %v1828
    %v1830 = vadd.f32 %v1824, %v1828
    %v1831 = vpack.c.bf16 %v1830, %v1829
    %s1832 = scalar_lea.vmem %s5, 16
    %v1833 = vld [vmem:[%s1832] sm:$0xf]
    %v1834 = vld [vmem:[%s1832 + $0x4] sm:$0xf]
    %v1835 = vld [vmem:[%s1832 + $0x8] sm:$0xf]
    %v1836 = vld [vmem:[%s1832 + $0xc] sm:$0xf]
    %s1837 = scalar_lea.vmem %s6, 1
    %v1838 = vld [vmem:[%s1837] sm:$0x1]
    %v1840 = vlaneseq
    %v1841 = vshrl.u32 %v1840, 7
    %v1842 = vsub.s32 0, %v1841
    %v1843 = vrot.slane %v1838, %v1842
    %v1849 = vunpack.c.l.b16 %v1833
    %v1850 = vunpack.c.l.b16 %v1834
    %v1851 = vunpack.c.l.b16 %v1835
    %v1852 = vunpack.c.l.b16 %v1836
    %v1853 = vpack.c.b16 %v1850, %v1849
    %v1854 = vpack.c.b16 %v1852, %v1851
    %v1858 = vsel %vm69, %v1831, 0
    %1860 = vmatprep.subr.bf16.mxu0 0
    %1861 = vmatpush1.bf16.msra.mxu0 0
    %1862 = vmatprep.subr.bf16.mxu0 0
    %1863 = vmatpush1.bf16.msra.mxu0 0
    %1864 = vmatprep.subr.bf16.mxu0 0
    %1865 = vmatpush1.bf16.msra.mxu0 0
    %1866 = vmatprep.subr.bf16.mxu0 0
    %1867 = vmatpush1.bf16.msra.mxu0 0
    %1868 = vmatprep.subr.bf16.mxu0 0
    %1869 = vmatpush1.bf16.msra.mxu0 0
    %1870 = vmatprep.subr.bf16.mxu0 0
    %1871 = vmatpush1.bf16.msra.mxu0 0
    %1872 = vmatprep.subr.bf16.mxu0 0
    %1873 = vmatpush1.bf16.msra.mxu0 %v1854
    %1874 = vmatprep.subr.bf16.mxu0 0
    %1875 = vmatpush1.bf16.msra.mxu0 %v1853
    %1876 = vmatprep.subr.bf16.mxu0 0
    %1877 = vmatpush2.bf16.msra.mxu0 0
    %1878 = vmatprep.subr.bf16.mxu0 0
    %1879 = vmatpush2.bf16.msra.mxu0 0
    %1880 = vmatprep.subr.bf16.mxu0 0
    %1881 = vmatpush2.bf16.msra.mxu0 0
    %1882 = vmatprep.subr.bf16.mxu0 0
    %1883 = vmatpush2.bf16.msra.mxu0 0
    %1884 = vmatprep.subr.bf16.mxu0 0
    %1885 = vmatpush2.bf16.msra.mxu0 0
    %1886 = vmatprep.subr.bf16.mxu0 0
    %1887 = vmatpush2.bf16.msra.mxu0 0
    %1888 = vmatprep.subr.bf16.mxu0 0
    %1889 = vmatpush2.bf16.msra.mxu0 0
    %1890 = vmatprep.subr.bf16.mxu0 0
    %1891 = vmatpush2.bf16.msra.mxu0 0
    %1892 = vmatprep.mubr.bf16.mxu0 0
    %1893 = vmatmul.mubr.bf16.gmra.mxu0 %v1858
    %v1894 = vpop.f32.mrf.mxu0
    %v1895 = vadd.f32 %v1843, %v1894
    %v1896 = vpop.f32.mrf.mxu0
    %v1897 = vpop.f32.mrf.mxu0
    %v1898 = vadd.f32 %v1843, %v1897
    %v1899 = vpop.f32.mrf.mxu0
    %1900 = vdwg.mxu0
    %v1901 = vmul.f32 %v1895, 0.5
    %v1902 = vmul.f32 %v1898, 0.5
    %v1903 = vmul.f32 %v1895, 0.044715
    %v1904 = vmul.f32 %v1898, 0.044715
    %v1905 = vmul.f32 %v1903, %v1895
    %v1906 = vmul.f32 %v1904, %v1898
    %v1907 = vmul.f32 %v1905, %v1895
    %v1908 = vmul.f32 %v1906, %v1898
    %v1909 = vadd.f32 %v1895, %v1907
    %v1910 = vadd.f32 %v1898, %v1908
    %v1911 = vmul.f32 %v1909, 0.7978846
    %v1912 = vmul.f32 %v1910, 0.7978846
    %v1913 = vtanh.pop %v1911
    %v1914 = vtanh.pop %v1912
    %v1915 = vadd.f32 %v1913, 1.0
    %v1916 = vadd.f32 %v1914, 1.0
    %v1917 = vmul.f32 %v1901, %v1915
    %v1918 = vmul.f32 %v1902, %v1916
    %v1919 = vpack.c.bf16 %v1918, %v1917
    %s1920 = scalar_lea.vmem %s7, 32
    %v1921 = vld [vmem:[%s1920] sm:$0xf]
    %v1922 = vld [vmem:[%s1920 + $0x4] sm:$0xf]
    %v1923 = vld [vmem:[%s1920 + $0x8] sm:$0xf]
    %v1924 = vld [vmem:[%s1920 + $0xc] sm:$0xf]
    %v1925 = vld [vmem:[%s1920 + $0x10] sm:$0xf]
    %v1926 = vld [vmem:[%s1920 + $0x14] sm:$0xf]
    %v1927 = vld [vmem:[%s1920 + $0x18] sm:$0xf]
    %v1928 = vld [vmem:[%s1920 + $0x1c] sm:$0xf]
    %v1929 = vlaneseq
    %v1930 = vshrl.u32 %v1929, 7
    %v1931 = vsub.s32 3, %v1930
    %v1932 = vrot.slane %v1042, %v1931
    %v1941 = vunpack.c.l.b16 %v1921
    %v1942 = vunpack.c.l.b16 %v1922
    %v1943 = vunpack.c.l.b16 %v1923
    %v1944 = vunpack.c.l.b16 %v1924
    %v1945 = vunpack.c.l.b16 %v1925
    %v1946 = vunpack.c.l.b16 %v1926
    %v1947 = vunpack.c.l.b16 %v1927
    %v1948 = vunpack.c.l.b16 %v1928
    %v1949 = vpack.c.b16 %v1942, %v1941
    %v1950 = vpack.c.b16 %v1944, %v1943
    %v1951 = vpack.c.b16 %v1946, %v1945
    %v1952 = vpack.c.b16 %v1948, %v1947
    %v1958 = vsel %vm956, %v1919, 0
    %1960 = vmatprep.subr.bf16.mxu0 0
    %1961 = vmatpush1.bf16.msra.mxu0 0
    %1962 = vmatprep.subr.bf16.mxu0 0
    %1963 = vmatpush1.bf16.msra.mxu0 0
    %1964 = vmatprep.subr.bf16.mxu0 0
    %1965 = vmatpush1.bf16.msra.mxu0 0
    %1966 = vmatprep.subr.bf16.mxu0 0
    %1967 = vmatpush1.bf16.msra.mxu0 0
    %1968 = vmatprep.subr.bf16.mxu0 0
    %1969 = vmatpush1.bf16.msra.mxu0 %v1952
    %1970 = vmatprep.subr.bf16.mxu0 0
    %1971 = vmatpush1.bf16.msra.mxu0 %v1951
    %1972 = vmatprep.subr.bf16.mxu0 0
    %1973 = vmatpush1.bf16.msra.mxu0 %v1950
    %1974 = vmatprep.subr.bf16.mxu0 0
    %1975 = vmatpush1.bf16.msra.mxu0 %v1949
    %1976 = vmatprep.subr.bf16.mxu0 0
    %1977 = vmatpush2.bf16.msra.mxu0 0
    %1978 = vmatprep.subr.bf16.mxu0 0
    %1979 = vmatpush2.bf16.msra.mxu0 0
    %1980 = vmatprep.subr.bf16.mxu0 0
    %1981 = vmatpush2.bf16.msra.mxu0 0
    %1982 = vmatprep.subr.bf16.mxu0 0
    %1983 = vmatpush2.bf16.msra.mxu0 0
    %1984 = vmatprep.subr.bf16.mxu0 0
    %1985 = vmatpush2.bf16.msra.mxu0 0
    %1986 = vmatprep.subr.bf16.mxu0 0
    %1987 = vmatpush2.bf16.msra.mxu0 0
    %1988 = vmatprep.subr.bf16.mxu0 0
    %1989 = vmatpush2.bf16.msra.mxu0 0
    %1990 = vmatprep.subr.bf16.mxu0 0
    %1991 = vmatpush2.bf16.msra.mxu0 0
    %1992 = vmatprep.mubr.bf16.mxu0 0
    %1993 = vmatmul.mubr.bf16.gmra.mxu0 %v1958
    %v1994 = vpop.f32.mrf.mxu0
    %v1995 = vadd.f32 %v1932, %v1994
    %v1996 = vpop.f32.mrf.mxu0
    %v1997 = vpop.f32.mrf.mxu0
    %v1998 = vadd.f32 %v1932, %v1997
    %v1999 = vpop.f32.mrf.mxu0
    %2000 = vdwg.mxu0
    %v2001 = vadd.f32 %v1829, %v1995
    %v2002 = vadd.f32 %v1830, %v1998
    %v2003 = vsel %vm69, %v2001, 0.0
    %2004 = vadd.xlane.f32.xlu0 %v2003
    %v2005 = vpop.xlane.xlu0 %2004
    %v2006 = vsel %vm69, %v2002, 0.0
    %2007 = vadd.xlane.f32.xlu0 %v2006
    %v2008 = vpop.xlane.xlu0 %2007
    %v2009 = vmul.f32 %v2005, %v800
    %v2010 = vmul.f32 %v2008, %v800
    %v2011 = vsub.f32 %v2001, %v2009
    %v2012 = vsub.f32 %v2002, %v2010
    %v2013 = vmul.f32 %v2011, %v2011
    %v2014 = vmul.f32 %v2012, %v2012
    %v2015 = vsel %vm69, %v2013, 0.0
    %2016 = vadd.xlane.f32.xlu0 %v2015
    %v2017 = vpop.xlane.xlu0 %2016
    %v2018 = vsel %vm69, %v2014, 0.0
    %2019 = vadd.xlane.f32.xlu0 %v2018
    %v2020 = vpop.xlane.xlu0 %2019
    %v2021 = vmul.f32 %v2017, %v800
    %v2022 = vmul.f32 %v2020, %v800
    %v2023 = vadd.f32 %v2021, 1e-05
    %v2024 = vadd.f32 %v2022, 1e-05
    %v2025 = vrsqrt.pop %v2023
    %v2026 = vrsqrt.pop %v2024
    %v2027 = vmul.f32 %v2011, %v2025
    %v2028 = vmul.f32 %v2012, %v2026
    %v2029 = vlaneseq
    %v2030 = vshrl.u32 %v2029, 7
    %v2031 = vsub.s32 4, %v2030
    %v2032 = vrot.slane %v1042, %v2031
    %v2033 = vmul.f32 %v2027, %v2032
    %v2034 = vmul.f32 %v2028, %v2032
    %v2035 = vlaneseq
    %v2036 = vshrl.u32 %v2035, 7
    %v2037 = vsub.s32 5, %v2036
    %v2038 = vrot.slane %v1042, %v2037
    %v2039 = vadd.f32 %v2033, %v2038
    %v2040 = vadd.f32 %v2034, %v2038
    %2041 = vst.msk [vmem:[#allocation2] sm:$0xff] %vm69, %v2039
    %2042 = vst.msk [vmem:[#allocation2 + $0x8] sm:$0xff] %vm69, %v2040
    %v2043 = vld [vmem:[#allocation2] ss:$8 sm:$0x3]
    %v2044 = vpack.c.bf16 %v2043, %v2043
    %v2045 = vld [vmem:[%s9] sm:$0xf]
    %v2046 = vld [vmem:[%s9 + $0x4] sm:$0xf]
    %v2047 = vld [vmem:[%s9 + $0x8] sm:$0xf]
    %v2048 = vld [vmem:[%s9 + $0xc] sm:$0xf]
    %v2049 = vld [vmem:[%s10] sm:$0x1]
    %v2051 = vlaneseq
    %v2052 = vshrl.u32 %v2051, 7
    %v2053 = vsub.s32 0, %v2052
    %v2054 = vrot.slane %v2049, %v2053
    %v2060 = vunpack.c.l.b16 %v2045
    %v2061 = vunpack.c.l.b16 %v2046
    %v2062 = vunpack.c.l.b16 %v2047
    %v2063 = vunpack.c.l.b16 %v2048
    %v2064 = vpack.c.b16 %v2061, %v2060
    %v2065 = vpack.c.b16 %v2063, %v2062
    %v2069 = vsel %vm69, %v2044, 0
    %2071 = vmatprep.subr.bf16.mxu0 0
    %2072 = vmatpush1.bf16.msra.mxu0 0
    %2073 = vmatprep.subr.bf16.mxu0 0
    %2074 = vmatpush1.bf16.msra.mxu0 0
    %2075 = vmatprep.subr.bf16.mxu0 0
    %2076 = vmatpush1.bf16.msra.mxu0 0
    %2077 = vmatprep.subr.bf16.mxu0 0
    %2078 = vmatpush1.bf16.msra.mxu0 0
    %2079 = vmatprep.subr.bf16.mxu0 0
    %2080 = vmatpush1.bf16.msra.mxu0 0
    %2081 = vmatprep.subr.bf16.mxu0 0
    %2082 = vmatpush1.bf16.msra.mxu0 0
    %2083 = vmatprep.subr.bf16.mxu0 0
    %2084 = vmatpush1.bf16.msra.mxu0 %v2065
    %2085 = vmatprep.subr.bf16.mxu0 0
    %2086 = vmatpush1.bf16.msra.mxu0 %v2064
    %2087 = vmatprep.subr.bf16.mxu0 0
    %2088 = vmatpush2.bf16.msra.mxu0 0
    %2089 = vmatprep.subr.bf16.mxu0 0
    %2090 = vmatpush2.bf16.msra.mxu0 0
    %2091 = vmatprep.subr.bf16.mxu0 0
    %2092 = vmatpush2.bf16.msra.mxu0 0
    %2093 = vmatprep.subr.bf16.mxu0 0
    %2094 = vmatpush2.bf16.msra.mxu0 0
    %2095 = vmatprep.subr.bf16.mxu0 0
    %2096 = vmatpush2.bf16.msra.mxu0 0
    %2097 = vmatprep.subr.bf16.mxu0 0
    %2098 = vmatpush2.bf16.msra.mxu0 0
    %2099 = vmatprep.subr.bf16.mxu0 0
    %2100 = vmatpush2.bf16.msra.mxu0 0
    %2101 = vmatprep.subr.bf16.mxu0 0
    %2102 = vmatpush2.bf16.msra.mxu0 0
    %2103 = vmatprep.mubr.bf16.mxu0 0
    %2104 = vmatmul.mubr.bf16.gmra.mxu0 %v2069
    %v2105 = vpop.f32.mrf.mxu0
    %v2106 = vadd.f32 %v2054, %v2105
    %v2107 = vpop.f32.mrf.mxu0
    %v2108 = vpop.f32.mrf.mxu0
    %v2109 = vpop.f32.mrf.mxu0
    %2110 = vdwg.mxu0
    %vm2111 = vcmask 17408
    %2112 = vst.msk [vmem:[#allocation3] sm:$0x3] %vm2111, %v2106
    // Predicated region
    $region46: #{llm_forward.1} parent=1 // pred_check
      _
    $region47: #{llm_forward.1} parent=1 // pred_check_branch
      %2114 = sbr.rel (0) target = $region49
    $region48: #{llm_forward.1} parent=1 // pred_region
      %s2116 = ssub.s32 32, 32
      %2117 = vsyncadd [#allocation4], %s2116
      %s2119 = sshll.u32 [#allocation3], 4
      %s2120 = int_to_ptr.vmem [resolvable:$true] %s2119
      %2122 = dma.vmem_to_hbm [thread:$0]  %s2120, 32, %s11, [#allocation4]
    $region49: #{llm_forward.1} parent=1 // pred_fallthru
      _
    // Predicated region
    $region50: #{llm_forward.1} parent=1 // pred_check
      _
    $region51: #{llm_forward.1} parent=1 // pred_check_branch
      %2124 = sbr.rel (0) target = $region53
    $region52: #{llm_forward.1} parent=1 // pred_region
      %2125 = dma.done [#allocation4], 32
    $region53: #{llm_forward.1} parent=1 // pred_fallthru
      _
    %2126 = vsyncpa [#allocation4], 1

</llo_original>
